<compile_context>
chip_gen: v7x
topology: tpu7x:2x2x1
jax: 0.10.0
libtpu: 0.0.40
codegen_flags: <defaults>
</compile_context>

<pallas_src>
import functools

import jax
import jax.numpy as jnp
from jax.experimental import pallas as pl
from jax.experimental.pallas import tpu as pltpu


def _corblock_kernel(xm_ref, xh_ref, w_ref, b_ref, o_ref, *, TH, W, Wo):
    # xm_ref : (1, 2*TH, W+2, C_in)  rows of the padded input owned by this tile
    # xh_ref : (1, HB,   W+2, C_in)  halo rows just below the tile (first 3 used)
    # w_ref  : (9*C_in, C_out)       conv weights, K ordered as (kh, kw, c_in)
    # b_ref  : (1, C_out)            bias (f32)
    # o_ref  : (1, TH, Wo, C_out)    pooled output rows of this tile
    RB = 2 * TH                # conv rows "owned" by the tile
    R = RB + 1                 # conv rows computed (1 extra row above for the pool)
    C_out = o_ref.shape[-1]

    xm = xm_ref[0]                                  # (RB, W+2, C_in)
    xh = xh_ref[0, :3]                              # (3,  W+2, C_in)
    x_all = jnp.concatenate([xm, xh], axis=0)       # (RB+3, W+2, C_in)

    # --- Conv2d(3x3, s=1, p=1): one fused matmul with K = 9*C_in (im2col) ---
    taps = []
    for kh in range(3):
        for kw in range(3):
            taps.append(x_all[kh:kh + R, kw:kw + W, :])      # (R, W, C_in)
    patches = jnp.concatenate(taps, axis=-1)                 # (R, W, 9*C_in)
    patches = patches.reshape(R * W, patches.shape[-1])

    acc = jnp.dot(patches, w_ref[...], preferred_element_type=jnp.float32)
    relu = jnp.maximum(acc + b_ref[...], 0.0).reshape(R, W, C_out)

    # Local conv row 0 is global conv row 2*TH*t - 1; on the first row tile it is
    # the maxpool's zero-padding row (zero == -inf here because relu >= 0).
    is_first = pl.program_id(1) == 0
    row_ids = jax.lax.broadcasted_iota(jnp.int32, (R, 1, 1), 0)
    relu = jnp.where(jnp.logical_and(is_first, row_ids == 0), 0.0, relu)

    # --- MaxPool2d(k=3, s=2, p=1) ---
    # rows: pooled row i <- conv rows 2i, 2i+1, 2i+2 (local indices)
    body = relu[:RB].reshape(TH, 2, W, C_out)                # rows (2i, 2i+1)
    bot = relu[1:].reshape(TH, 2, W, C_out)[:, 1]            # row   2i+2
    rmax = jnp.maximum(jnp.maximum(body[:, 0], body[:, 1]), bot)   # (TH, W, C_out)

    # cols: pooled col j <- conv cols 2j-1 (zero for j == 0), 2j, 2j+1
    rr = rmax.reshape(TH, Wo, 2, C_out)
    center_right = jnp.maximum(rr[:, :, 0, :], rr[:, :, 1, :])     # cols 2j, 2j+1
    left = jnp.concatenate(
        [jnp.zeros((TH, 1, C_out), rmax.dtype), rr[:, :Wo - 1, 1, :]], axis=1)
    pooled = jnp.maximum(center_right, left)                       # (TH, Wo, C_out)

    o_ref[...] = pooled[None].astype(o_ref.dtype)


def corblock_z(x_nchw, weight, bias, *, kernel_size=3, stride=1,
               tile_rows=16, compute_dtype=jnp.bfloat16):
    """CORblock_Z forward. x_nchw: (N, C_in, H, W); weight: (C_out, C_in, 3, 3)."""
    assert kernel_size == 3 and stride == 1, "only the CORblock_Z defaults are supported"
    N, C_in, H, W = x_nchw.shape
    C_out, C_in_w, KH, KW = weight.shape
    assert (C_in_w, KH, KW) == (C_in, 3, 3)
    assert H % 2 == 0 and W % 2 == 0 and H >= 4 and W >= 4, "kernel assumes even H, W >= 4"
    Ho, Wo = H // 2, W // 2

    # Pooled rows per grid step: largest divisor of Ho that is <= tile_rows.
    max_th = min(Ho, max(int(tile_rows), 1))
    TH = max(d for d in range(1, max_th + 1) if Ho % d == 0)
    n_tiles = Ho // TH
    RB = 2 * TH                                        # padded-input rows per tile
    HB = 8 if RB % 8 == 0 else (4 if RB % 4 == 0 else RB)  # halo block rows (divides RB, >= 3)
    assert HB >= 3

    # NCHW -> NHWC, bf16 cast and conv/halo zero padding as XLA glue.
    # TODO(synk): fold the layout transpose + spatial zero-pad into the kernel
    # (in-kernel halo masking / manual DMA) to remove these extra HBM passes.
    bottom = max(1, HB - 2)                            # keeps every halo block in-bounds
    x = jnp.transpose(x_nchw, (0, 2, 3, 1)).astype(compute_dtype)
    xpad = jnp.pad(x, ((0, 0), (2, bottom), (1, 1), (0, 0)))
    Hp, Wp = H + 2 + bottom, W + 2

    w = jnp.transpose(weight, (2, 3, 1, 0)).reshape(KH * KW * C_in, C_out)
    w = w.astype(compute_dtype)
    b = bias.reshape(1, C_out).astype(jnp.float32)

    kernel = functools.partial(_corblock_kernel, TH=TH, W=W, Wo=Wo)

    out_nhwc = pl.pallas_call(
        kernel,
        out_shape=jax.ShapeDtypeStruct((N, Ho, Wo, C_out), x_nchw.dtype),
        grid_spec=pltpu.PrefetchScalarGridSpec(
            num_scalar_prefetch=0,
            grid=(N, n_tiles),
            in_specs=[
                # rows owned by tile t: padded rows [2*TH*t, 2*TH*t + 2*TH)
                pl.BlockSpec((1, RB, Wp, C_in), lambda n, t: (n, t, 0, 0)),
                # bottom halo: padded rows [2*TH*(t+1), 2*TH*(t+1) + HB)
                pl.BlockSpec((1, HB, Wp, C_in),
                             lambda n, t: (n, (RB // HB) * (t + 1), 0, 0)),
                pl.BlockSpec((KH * KW * C_in, C_out), lambda n, t: (0, 0)),
                pl.BlockSpec((1, C_out), lambda n, t: (0, 0)),
            ],
            out_specs=pl.BlockSpec((1, TH, Wo, C_out), lambda n, t: (n, t, 0, 0)),
        ),
        compiler_params=pltpu.CompilerParams(
            dimension_semantics=("parallel", "parallel")),
    )(xpad, xpad, w, b)

    return jnp.transpose(out_nhwc, (0, 3, 1, 2))       # NHWC -> NCHW


def _reference(x_nchw, weight, bias, compute_dtype=jnp.bfloat16):
    """Pure-JAX reference with the same numerics as the kernel (bf16 inputs, f32 acc)."""
    x = jnp.transpose(x_nchw, (0, 2, 3, 1)).astype(compute_dtype).astype(jnp.float32)
    w = jnp.transpose(weight, (2, 3, 1, 0)).astype(compute_dtype).astype(jnp.float32)
    conv = jax.lax.conv_general_dilated(
        x, w, window_strides=(1, 1), padding=((1, 1), (1, 1)),
        dimension_numbers=("NHWC", "HWIO", "NHWC"))
    conv = conv + bias[None, None, None, :]
    relu = jnp.maximum(conv, 0.0)
    pooled = jax.lax.reduce_window(
        relu, -jnp.inf, jax.lax.max,
        window_dimensions=(1, 3, 3, 1), window_strides=(1, 2, 2, 1),
        padding=((0, 0), (1, 1), (1, 1), (0, 0)))
    return jnp.transpose(pooled, (0, 3, 1, 2))


if __name__ == "__main__":
    key = jax.random.PRNGKey(0)
    k_x, k_w, k_b = jax.random.split(key, 3)

    N, C_in, C_out, H, W = 2, 4, 8, 16, 16
    x = jax.random.normal(k_x, (N, C_in, H, W), jnp.float32)
    weight = 0.1 * jax.random.normal(k_w, (C_out, C_in, 3, 3), jnp.float32)
    bias = 0.1 * jax.random.normal(k_b, (C_out,), jnp.float32)

    ref = _reference(x, weight, bias)

    # Exercise both the multi-row-tile path (grid=(N, 2)) and single-tile path (grid=(N, 1)).
    for tile_rows in (4, 16):
        out = corblock_z(x, weight, bias, tile_rows=tile_rows)
        jax.block_until_ready(out)
        assert out.shape == ref.shape == (N, C_out, H // 2, W // 2)
        assert jnp.allclose(out, ref, atol=1e-3, rtol=1e-3), \
            f"mismatch vs reference (tile_rows={tile_rows})"

    print("KERNEL_OK")
</pallas_src>

<mosaic_0001>
module attributes {stable_mosaic.version = 11 : i64} {
  func.func @_corblock_kernel(%arg0: i32, %arg1: i32, %arg2: memref<1x8x18x4xbf16, #tpu.memory_space<vmem>>, %arg3: memref<1x8x18x4xbf16, #tpu.memory_space<vmem>>, %arg4: memref<36x8xbf16, #tpu.memory_space<vmem>>, %arg5: memref<1x8xf32, #tpu.memory_space<vmem>>, %arg6: memref<1x4x8x8xf32, #tpu.memory_space<vmem>>) attributes {dimension_semantics = [#tpu.dimension_semantics<parallel>, #tpu.dimension_semantics<parallel>], iteration_bounds = array<i64: 2, 2>, scalar_prefetch = 0 : i64, scratch_operands = 0 : i64, tpu.core_type = #tpu.core_type<tc>, window_params = [{transform_indices = @transform_0, window_bounds = array<i64: 1, 8, 18, 4>}, {transform_indices = @transform_1, window_bounds = array<i64: 1, 8, 18, 4>}, {pipeline_mode = #tpu.pipeline_mode<synchronous>, transform_indices = @transform_2, window_bounds = array<i64: 36, 8>}, {pipeline_mode = #tpu.pipeline_mode<synchronous>, transform_indices = @transform_3, window_bounds = array<i64: 1, 8>}, {transform_indices = @transform_4, window_bounds = array<i64: 1, 4, 8, 8>}]} {
    %c0 = arith.constant 0 : index
    %c0_0 = arith.constant 0 : index
    %c0_1 = arith.constant 0 : index
    %c0_2 = arith.constant 0 : index
    %0 = vector.load %arg2[%c0, %c0_0, %c0_1, %c0_2] : memref<1x8x18x4xbf16, #tpu.memory_space<vmem>>, vector<1x8x18x4xbf16>
    %1 = vector.shape_cast %0 : vector<1x8x18x4xbf16> to vector<8x18x4xbf16>
    %c0_3 = arith.constant 0 : index
    %c0_4 = arith.constant 0 : index
    %c0_5 = arith.constant 0 : index
    %c0_6 = arith.constant 0 : index
    %2 = vector.load %arg3[%c0_3, %c0_4, %c0_5, %c0_6] : memref<1x8x18x4xbf16, #tpu.memory_space<vmem>>, vector<1x3x18x4xbf16>
    %3 = vector.shape_cast %2 : vector<1x3x18x4xbf16> to vector<3x18x4xbf16>
    %4 = tpu.concatenate %1, %3 in 0 : vector<8x18x4xbf16>, vector<3x18x4xbf16> -> vector<11x18x4xbf16>
    %5 = vector.extract_strided_slice %4 {offsets = [0, 0, 0], sizes = [9, 16, 4], strides = [1, 1, 1]} : vector<11x18x4xbf16> to vector<9x16x4xbf16>
    %6 = vector.extract_strided_slice %4 {offsets = [0, 1, 0], sizes = [9, 16, 4], strides = [1, 1, 1]} : vector<11x18x4xbf16> to vector<9x16x4xbf16>
    %7 = vector.extract_strided_slice %4 {offsets = [0, 2, 0], sizes = [9, 16, 4], strides = [1, 1, 1]} : vector<11x18x4xbf16> to vector<9x16x4xbf16>
    %8 = vector.extract_strided_slice %4 {offsets = [1, 0, 0], sizes = [9, 16, 4], strides = [1, 1, 1]} : vector<11x18x4xbf16> to vector<9x16x4xbf16>
    %9 = vector.extract_strided_slice %4 {offsets = [1, 1, 0], sizes = [9, 16, 4], strides = [1, 1, 1]} : vector<11x18x4xbf16> to vector<9x16x4xbf16>
    %10 = vector.extract_strided_slice %4 {offsets = [1, 2, 0], sizes = [9, 16, 4], strides = [1, 1, 1]} : vector<11x18x4xbf16> to vector<9x16x4xbf16>
    %11 = vector.extract_strided_slice %4 {offsets = [2, 0, 0], sizes = [9, 16, 4], strides = [1, 1, 1]} : vector<11x18x4xbf16> to vector<9x16x4xbf16>
    %12 = vector.extract_strided_slice %4 {offsets = [2, 1, 0], sizes = [9, 16, 4], strides = [1, 1, 1]} : vector<11x18x4xbf16> to vector<9x16x4xbf16>
    %13 = vector.extract_strided_slice %4 {offsets = [2, 2, 0], sizes = [9, 16, 4], strides = [1, 1, 1]} : vector<11x18x4xbf16> to vector<9x16x4xbf16>
    %14 = tpu.concatenate %5, %6, %7, %8, %9, %10, %11, %12, %13 in 2 : vector<9x16x4xbf16>, vector<9x16x4xbf16>, vector<9x16x4xbf16>, vector<9x16x4xbf16>, vector<9x16x4xbf16>, vector<9x16x4xbf16>, vector<9x16x4xbf16>, vector<9x16x4xbf16>, vector<9x16x4xbf16> -> vector<9x16x36xbf16>
    %15 = vector.shape_cast %14 : vector<9x16x36xbf16> to vector<144x36xbf16>
    %c0_7 = arith.constant 0 : index
    %c0_8 = arith.constant 0 : index
    %16 = vector.load %arg4[%c0_7, %c0_8] : memref<36x8xbf16, #tpu.memory_space<vmem>>, vector<36x8xbf16>
    %cst = arith.constant dense<0.000000e+00> : vector<144x8xf32>
    %17 = tpu.matmul %15, %16, %cst {dimension_numbers = #tpu.dot_dimension_numbers<[1], [0], [0], [1], [0, 0, 1, 1], [], []>} : vector<144x36xbf16>, vector<36x8xbf16>, vector<144x8xf32> -> vector<144x8xf32>
    %c0_9 = arith.constant 0 : index
    %c0_10 = arith.constant 0 : index
    %18 = vector.load %arg5[%c0_9, %c0_10] : memref<1x8xf32, #tpu.memory_space<vmem>>, vector<1x8xf32>
    %19 = vector.broadcast %18 : vector<1x8xf32> to vector<144x8xf32>
    %20 = arith.addf %17, %19 : vector<144x8xf32>
    %cst_11 = arith.constant 0.000000e+00 : f32
    %21 = vector.broadcast %cst_11 : f32 to vector<144x8xf32>
    %22 = arith.maximumf %20, %21 : vector<144x8xf32>
    %23 = vector.shape_cast %22 : vector<144x8xf32> to vector<9x16x8xf32>
    %c0_i32 = arith.constant 0 : i32
    %24 = arith.cmpi eq, %arg1, %c0_i32 : i32
    %25 = tpu.iota {dimensions = array<i32: 0>} : vector<9x1x1xi32>
    %c0_i32_12 = arith.constant 0 : i32
    %26 = vector.broadcast %c0_i32_12 : i32 to vector<9x1x1xi32>
    %27 = arith.cmpi eq, %25, %26 : vector<9x1x1xi32>
    %28 = vector.broadcast %24 : i1 to vector<9x1x1xi1>
    %29 = arith.andi %28, %27 : vector<9x1x1xi1>
    %cst_13 = arith.constant 0.000000e+00 : f32
    %30 = vector.shape_cast %29 : vector<9x1x1xi1> to vector<9x1x1xi1>
    %31 = vector.broadcast %30 : vector<9x1x1xi1> to vector<9x16x8xi1>
    %32 = vector.broadcast %cst_13 : f32 to vector<9x16x8xf32>
    %33 = arith.select %31, %32, %23 : vector<9x16x8xi1>, vector<9x16x8xf32>
    %34 = vector.extract_strided_slice %33 {offsets = [0, 0, 0], sizes = [8, 16, 8], strides = [1, 1, 1]} : vector<9x16x8xf32> to vector<8x16x8xf32>
    %35 = vector.shape_cast %34 : vector<8x16x8xf32> to vector<4x2x16x8xf32>
    %36 = vector.extract_strided_slice %33 {offsets = [1, 0, 0], sizes = [8, 16, 8], strides = [1, 1, 1]} : vector<9x16x8xf32> to vector<8x16x8xf32>
    %37 = vector.shape_cast %36 : vector<8x16x8xf32> to vector<4x2x16x8xf32>
    %38 = vector.extract_strided_slice %37 {offsets = [0, 1, 0, 0], sizes = [4, 1, 16, 8], strides = [1, 1, 1, 1]} : vector<4x2x16x8xf32> to vector<4x1x16x8xf32>
    %39 = vector.shape_cast %38 : vector<4x1x16x8xf32> to vector<4x16x8xf32>
    %40 = vector.extract_strided_slice %35 {offsets = [0, 0, 0, 0], sizes = [4, 1, 16, 8], strides = [1, 1, 1, 1]} : vector<4x2x16x8xf32> to vector<4x1x16x8xf32>
    %41 = vector.shape_cast %40 : vector<4x1x16x8xf32> to vector<4x16x8xf32>
    %42 = vector.extract_strided_slice %35 {offsets = [0, 1, 0, 0], sizes = [4, 1, 16, 8], strides = [1, 1, 1, 1]} : vector<4x2x16x8xf32> to vector<4x1x16x8xf32>
    %43 = vector.shape_cast %42 : vector<4x1x16x8xf32> to vector<4x16x8xf32>
    %44 = arith.maximumf %41, %43 : vector<4x16x8xf32>
    %45 = arith.maximumf %44, %39 : vector<4x16x8xf32>
    %46 = vector.shape_cast %45 : vector<4x16x8xf32> to vector<4x8x2x8xf32>
    %47 = vector.extract_strided_slice %46 {offsets = [0, 0, 0, 0], sizes = [4, 8, 1, 8], strides = [1, 1, 1, 1]} : vector<4x8x2x8xf32> to vector<4x8x1x8xf32>
    %48 = vector.shape_cast %47 : vector<4x8x1x8xf32> to vector<4x8x8xf32>
    %49 = vector.extract_strided_slice %46 {offsets = [0, 0, 1, 0], sizes = [4, 8, 1, 8], strides = [1, 1, 1, 1]} : vector<4x8x2x8xf32> to vector<4x8x1x8xf32>
    %50 = vector.shape_cast %49 : vector<4x8x1x8xf32> to vector<4x8x8xf32>
    %51 = arith.maximumf %48, %50 : vector<4x8x8xf32>
    %cst_14 = arith.constant 0.000000e+00 : f32
    %52 = vector.broadcast %cst_14 : f32 to vector<4x1x8xf32>
    %53 = vector.extract_strided_slice %46 {offsets = [0, 0, 1, 0], sizes = [4, 7, 1, 8], strides = [1, 1, 1, 1]} : vector<4x8x2x8xf32> to vector<4x7x1x8xf32>
    %54 = vector.shape_cast %53 : vector<4x7x1x8xf32> to vector<4x7x8xf32>
    %55 = tpu.concatenate %52, %54 in 1 : vector<4x1x8xf32>, vector<4x7x8xf32> -> vector<4x8x8xf32>
    %56 = arith.maximumf %51, %55 : vector<4x8x8xf32>
    %57 = vector.shape_cast %56 : vector<4x8x8xf32> to vector<1x4x8x8xf32>
    %c0_15 = arith.constant 0 : index
    %c0_16 = arith.constant 0 : index
    %c0_17 = arith.constant 0 : index
    %c0_18 = arith.constant 0 : index
    %58 = vector.load %arg6[%c0_15, %c0_16, %c0_17, %c0_18] : memref<1x4x8x8xf32, #tpu.memory_space<vmem>>, vector<1x4x8x8xf32>
    tpu.vector_store %arg6[%c0_15, %c0_16, %c0_17, %c0_18], %57 {strides = array<i32>} : memref<1x4x8x8xf32, #tpu.memory_space<vmem>>, vector<1x4x8x8xf32>,
    return
  }
  func.func @transform_0(%arg0: i32, %arg1: i32) -> (i32, i32, i32, i32) {
    %c0_i32 = arith.constant 0 : i32
    %c0_i32_0 = arith.constant 0 : i32
    %c0_i32_1 = arith.constant 0 : i32
    return %arg0, %arg1, %c0_i32, %c0_i32_0 : i32, i32, i32, i32
  }
  func.func @transform_1(%arg0: i32, %arg1: i32) -> (i32, i32, i32, i32) {
    %c1_i32 = arith.constant 1 : i32
    %0 = arith.addi %arg1, %c1_i32 : i32
    %c1_i32_0 = arith.constant 1 : i32
    %1 = arith.muli %c1_i32_0, %0 : i32
    %c0_i32 = arith.constant 0 : i32
    %c0_i32_1 = arith.constant 0 : i32
    %c0_i32_2 = arith.constant 0 : i32
    return %arg0, %1, %c0_i32, %c0_i32_1 : i32, i32, i32, i32
  }
  func.func @transform_2(%arg0: i32, %arg1: i32) -> (i32, i32) {
    %c0_i32 = arith.constant 0 : i32
    %c0_i32_0 = arith.constant 0 : i32
    %c0_i32_1 = arith.constant 0 : i32
    return %c0_i32, %c0_i32_0 : i32, i32
  }
  func.func @transform_3(%arg0: i32, %arg1: i32) -> (i32, i32) {
    %c0_i32 = arith.constant 0 : i32
    %c0_i32_0 = arith.constant 0 : i32
    %c0_i32_1 = arith.constant 0 : i32
    return %c0_i32, %c0_i32_0 : i32, i32
  }
  func.func @transform_4(%arg0: i32, %arg1: i32) -> (i32, i32, i32, i32) {
    %c0_i32 = arith.constant 0 : i32
    %c0_i32_0 = arith.constant 0 : i32
    %c0_i32_1 = arith.constant 0 : i32
    return %arg0, %arg1, %c0_i32, %c0_i32_0 : i32, i32, i32, i32
  }
}

</mosaic_0001>

<llo_original>
// kernel: tpu_custom_call.1
$region0: #{tpu_custom_call.1}
  #allocation0 [shape = 'u32[]', space=smem, size = 0x4, offset = 0x4, fixed_abs, tag = 'smem constant byte address 0x4 - core index']
  #allocation1 [shape = 'u32[144,128]{1,0:T(1,128)}', space=vmem, size = 0x12000, scoped, tag = 'internal scratch']
  %s0 = inlined_call_operand.vmem [shape: bf16[2,24,18,4], index: 0, kind: input, shape index: {}]
  %s1 = inlined_call_operand.vmem [shape: bf16[2,24,18,4], index: 1, kind: input, shape index: {}]
  %s2 = inlined_call_operand.vmem [shape: bf16[36,8], index: 2, kind: input, shape index: {}]
  %s3 = inlined_call_operand.vmem [shape: f32[1,8], index: 3, kind: input, shape index: {}]
  %s4 = inlined_call_operand.hbm [shape: f32[2,8,8,8], index: 4, kind: output, shape index: {}]
  %s5 = sld [smem:[#allocation0]]
  $region49: #{tpu_custom_call.1} parent=0
    _
  %s7 = ssub.s32 1, %s5
  %s8 = scalar_select 0, %s7, %s5
  $region1: #{tpu_custom_call.1} parent=0
    #allocation2 [shape = 'u8[32768]{0}', space=vmem, size = 0x8000, scoped, tag = 'output window, operand 0']
    #allocation3 [shape = 's32[2]{0}', space=sflag, size = 0x8, scoped, tag = 'scoped memory for tpu_custom_call.1']
    %9 = vsyncpa [#allocation3], 0
    %s10 = scalar_lea.sflag [#allocation3], 1
    %11 = vsyncpa %s10, 0
    loop: start=0, step=1, limit=6
    $region2: #{tpu_custom_call.1} parent=1 // loop_pre_header
      _
    $region3: #{tpu_custom_call.1} parent=1 // loop_header
      %s13 = sphi 0, %s17
      %p14 = scmp.ge.s32.totalorder %s13, 6
      %s20 = sphi 0, %s32
      %s21 = sphi 0, %s28
      %s22 = sphi 0, %s20
      %s23 = sphi 0, %s21
      %s24 = sphi 0, %s22
      %s25 = sphi 0, %s23
      %s37 = sphi 0, %s39
      %s40 = sphi 0, %s37
      %s41 = sphi 0, %s40
      %s57 = sphi 0, %s41
      %s67 = sphi 0, %s69
      %s70 = sphi 0, %s67
      %s71 = sphi 0, %s70
      %s87 = sphi 0, %s71
      %s91 = sphi 0, %s91
      %s93 = sphi 0, %s91
      %s94 = sphi 0, %s93
      %s108 = sphi 0, %s94
      %s112 = sphi 0, %s112
      %s114 = sphi 0, %s112
      %s115 = sphi 0, %s114
      %s129 = sphi 0, %s115
      %s137 = sphi 0, %s139
      %s140 = sphi 0, %s137
      %s141 = sphi 0, %s140
      %s157 = sphi 0, %s141
    $region4: #{tpu_custom_call.1} parent=1 // loop_header_branch
      %16 = sbr.rel (%p14) target = $region8
    $region5: #{tpu_custom_call.1} parent=1 // loop_body
      %s18 = ssub.s32 %s13, 1
      %s19 = ssub.s32 %s13, 2
      %s26 = sadd.s32 1, %s21
      %p27 = scmp.ge.s32.totalorder %s26, 2
      %s28 = scalar_select %p27, 0, %s26
      %s29 = sadd.s32 1, %s20
      %s30 = scalar_select %p27, %s29, %s20
      %p31 = scmp.ge.s32.totalorder %s30, 2
      %s32 = scalar_select %p31, 0, %s30
      %s33 = ssub.s32 %s20, %s32
      %s34 = ssub.s32 %s21, %s28
      %s35 = sor.u32 %s33, %s34
      %p36 = scmp.eq.s32.totalorder %s35, 0
      %s38 = sadd.s32 %s37, 1
      %s39 = scalar_select %p36, %s37, %s38
      %p42 = pneg %p36
      %p43 = scmp.eq.s32.totalorder %s13, 3
      %p44 = por %p42, %p43
      %p45 = scmp.ne.s32.totalorder %s37, %s40
      %p46 = scmp.eq.s32.totalorder %s13, 0
      %p47 = por %p45, %p46
      %p48 = scmp.ne.s32.totalorder %s37, %s40
      %p49 = scmp.eq.s32.totalorder %s18, 3
      %p50 = por %p48, %p49
      %p51 = scmp.ne.s32.totalorder %s40, %s41
      %p52 = scmp.eq.s32.totalorder %s18, 0
      %p53 = por %p51, %p52
      %p54 = scmp.ne.s32.totalorder %s40, %s41
      %p55 = scmp.eq.s32.totalorder %s19, 3
      %p56 = por %p54, %p55
      %p58 = scmp.ne.s32.totalorder %s41, %s57
      %p59 = scmp.eq.s32.totalorder %s19, 0
      %p60 = por %p58, %p59
      %s61 = sadd.s32 %s21, 1
      %s62 = sadd.s32 %s28, 1
      %s63 = ssub.s32 %s20, %s32
      %s64 = ssub.s32 %s61, %s62
      %s65 = sor.u32 %s63, %s64
      %p66 = scmp.eq.s32.totalorder %s65, 0
      %s68 = sadd.s32 %s67, 1
      %s69 = scalar_select %p66, %s67, %s68
      %p72 = pneg %p66
      %p73 = scmp.eq.s32.totalorder %s13, 3
      %p74 = por %p72, %p73
      %p75 = scmp.ne.s32.totalorder %s67, %s70
      %p76 = scmp.eq.s32.totalorder %s13, 0
      %p77 = por %p75, %p76
      %p78 = scmp.ne.s32.totalorder %s67, %s70
      %p79 = scmp.eq.s32.totalorder %s18, 3
      %p80 = por %p78, %p79
      %p81 = scmp.ne.s32.totalorder %s70, %s71
      %p82 = scmp.eq.s32.totalorder %s18, 0
      %p83 = por %p81, %p82
      %p84 = scmp.ne.s32.totalorder %s70, %s71
      %p85 = scmp.eq.s32.totalorder %s19, 3
      %p86 = por %p84, %p85
      %p88 = scmp.ne.s32.totalorder %s71, %s87
      %p89 = scmp.eq.s32.totalorder %s19, 0
      %p90 = por %p88, %p89
      %s92 = sadd.s32 %s91, 1
      %p95 = scmp.eq.s32.totalorder %s13, 3
      %p96 = scmp.ne.s32.totalorder %s91, %s93
      %p97 = scmp.eq.s32.totalorder %s13, 0
      %p98 = por %p96, %p97
      %p99 = scmp.ne.s32.totalorder %s91, %s93
      %p100 = scmp.eq.s32.totalorder %s18, 3
      %p101 = por %p99, %p100
      %p102 = scmp.ne.s32.totalorder %s93, %s94
      %p103 = scmp.eq.s32.totalorder %s18, 0
      %p104 = por %p102, %p103
      %p105 = scmp.ne.s32.totalorder %s93, %s94
      %p106 = scmp.eq.s32.totalorder %s19, 3
      %p107 = por %p105, %p106
      %p109 = scmp.ne.s32.totalorder %s94, %s108
      %p110 = scmp.eq.s32.totalorder %s19, 0
      %p111 = por %p109, %p110
      %s113 = sadd.s32 %s112, 1
      %p116 = scmp.eq.s32.totalorder %s13, 3
      %p117 = scmp.ne.s32.totalorder %s112, %s114
      %p118 = scmp.eq.s32.totalorder %s13, 0
      %p119 = por %p117, %p118
      %p120 = scmp.ne.s32.totalorder %s112, %s114
      %p121 = scmp.eq.s32.totalorder %s18, 3
      %p122 = por %p120, %p121
      %p123 = scmp.ne.s32.totalorder %s114, %s115
      %p124 = scmp.eq.s32.totalorder %s18, 0
      %p125 = por %p123, %p124
      %p126 = scmp.ne.s32.totalorder %s114, %s115
      %p127 = scmp.eq.s32.totalorder %s19, 3
      %p128 = por %p126, %p127
      %p130 = scmp.ne.s32.totalorder %s115, %s129
      %p131 = scmp.eq.s32.totalorder %s19, 0
      %p132 = por %p130, %p131
      %s133 = ssub.s32 %s20, %s32
      %s134 = ssub.s32 %s21, %s28
      %s135 = sor.u32 %s133, %s134
      %p136 = scmp.eq.s32.totalorder %s135, 0
      %s138 = sadd.s32 %s137, 1
      %s139 = scalar_select %p136, %s137, %s138
      %p142 = pneg %p136
      %p143 = scmp.eq.s32.totalorder %s13, 3
      %p144 = por %p142, %p143
      %p145 = scmp.ne.s32.totalorder %s137, %s140
      %p146 = scmp.eq.s32.totalorder %s13, 0
      %p147 = por %p145, %p146
      %p148 = scmp.ne.s32.totalorder %s137, %s140
      %p149 = scmp.eq.s32.totalorder %s18, 3
      %p150 = por %p148, %p149
      %p151 = scmp.ne.s32.totalorder %s140, %s141
      %p152 = scmp.eq.s32.totalorder %s18, 0
      %p153 = por %p151, %p152
      %p154 = scmp.ne.s32.totalorder %s140, %s141
      %p155 = scmp.eq.s32.totalorder %s19, 3
      %p156 = por %p154, %p155
      %p158 = scmp.ne.s32.totalorder %s141, %s157
      %p159 = scmp.eq.s32.totalorder %s19, 0
      %p160 = por %p158, %p159
      %p161 = scmp.le.s32.totalorder 1, %s13
      %p162 = scmp.lt.s32.totalorder %s13, 5
      %p163 = pnand %p161, %p162
      %p164 = pneg %p163
      // Predicated region
      $region9: #{tpu_custom_call.1} parent=5 // pred_check
        _
      $region10: #{tpu_custom_call.1} parent=5 // pred_check_branch
        %166 = sbr.rel (%p163) target = $region12
      $region11: #{tpu_custom_call.1} parent=5 // pred_region
        %s167 = ssub.s32 %s13, 1
        // Predicated region
        $region13: #{tpu_custom_call.1} parent=11 // pred_check
          %p168 = pneg %p104
        $region14: #{tpu_custom_call.1} parent=11 // pred_check_branch
          %170 = sbr.rel (%p168) target = $region16
        $region15: #{tpu_custom_call.1} parent=11 // pred_region
          _
        $region16: #{tpu_custom_call.1} parent=11 // pred_fallthru
          _
        // Predicated region
        $region17: #{tpu_custom_call.1} parent=11 // pred_check
          %p171 = pneg %p125
        $region18: #{tpu_custom_call.1} parent=11 // pred_check_branch
          %173 = sbr.rel (%p171) target = $region20
        $region19: #{tpu_custom_call.1} parent=11 // pred_region
          _
        $region20: #{tpu_custom_call.1} parent=11 // pred_fallthru
          _
      $region12: #{tpu_custom_call.1} parent=5 // pred_fallthru
        _
      %p174 = scmp.lt.s32.totalorder %s13, 4
      // Predicated region
      $region21: #{tpu_custom_call.1} parent=5 // pred_check
        %p175 = pneg %p174
      $region22: #{tpu_custom_call.1} parent=5 // pred_check_branch
        %177 = sbr.rel (%p175) target = $region24
      $region23: #{tpu_custom_call.1} parent=5 // pred_region
        // Predicated region
        $region25: #{tpu_custom_call.1} parent=23 // pred_check
          %p178 = pneg %p47
        $region26: #{tpu_custom_call.1} parent=23 // pred_check_branch
          %180 = sbr.rel (%p178) target = $region28
        $region27: #{tpu_custom_call.1} parent=23 // pred_region
          %s181 = smul.u32 8, %s21
          %p182 = scmp.lt.s32.totalorder %s20, 1
          %s183 = scalar_select %p182, %s20, 1
          %p184 = scmp.lt.s32.totalorder %s181, 23
          %s185 = scalar_select %p184, %s181, 23
          %s186 = smul.addr %s185, 3
          %s187 = smul.addr %s183, 72
          %s188 = sadd.s32 %s186, %s187
          %s189 = smul.addr %s188, 4
          %s190 = scalar_lea.vmem %s0, %s189
          %s191 = smul.u32 8, %s21
        $region28: #{tpu_custom_call.1} parent=23 // pred_fallthru
          _
        // Predicated region
        $region29: #{tpu_custom_call.1} parent=23 // pred_check
          %p192 = pneg %p77
        $region30: #{tpu_custom_call.1} parent=23 // pred_check_branch
          %194 = sbr.rel (%p192) target = $region32
        $region31: #{tpu_custom_call.1} parent=23 // pred_region
          %s195 = sadd.s32 %s21, 1
          %s196 = smul.u32 8, %s195
          %p197 = scmp.lt.s32.totalorder %s20, 1
          %s198 = scalar_select %p197, %s20, 1
          %p199 = scmp.lt.s32.totalorder %s196, 23
          %s200 = scalar_select %p199, %s196, 23
          %s201 = smul.addr %s200, 3
          %s202 = smul.addr %s198, 72
          %s203 = sadd.s32 %s201, %s202
          %s204 = smul.addr %s203, 4
          %s205 = scalar_lea.vmem %s1, %s204
          %s206 = sadd.s32 %s21, 1
          %s207 = smul.u32 8, %s206
        $region32: #{tpu_custom_call.1} parent=23 // pred_fallthru
          _
      $region24: #{tpu_custom_call.1} parent=5 // pred_fallthru
        _
      %p208 = scmp.le.s32.totalorder 1, %s13
      %p209 = scmp.lt.s32.totalorder %s13, 5
      %p210 = pnand %p208, %p209
      %p211 = pneg %p210
      // Predicated region
      $region33: #{tpu_custom_call.1} parent=5 // pred_check
        _
      $region34: #{tpu_custom_call.1} parent=5 // pred_check_branch
        %213 = sbr.rel (%p210) target = $region36
      $region35: #{tpu_custom_call.1} parent=5 // pred_region
        %s214 = ssub.s32 %s13, 1
        %s215 = smul.u32 8, %s23
        %p216 = scmp.lt.s32.totalorder %s22, 1
        %s217 = scalar_select %p216, %s22, 1
        %p218 = scmp.lt.s32.totalorder %s215, 23
        %s219 = scalar_select %p218, %s215, 23
        %s220 = smul.addr %s219, 3
        %s221 = smul.addr %s217, 72
        %s222 = sadd.s32 %s220, %s221
        %s223 = smul.addr %s222, 4
        %s224 = scalar_lea.vmem %s0, %s223
        %p225 = pneg %p53
        %p226 = pneg %p50
        %s227 = sadd.s32 %s23, 1
        %s228 = smul.u32 8, %s227
        %p229 = scmp.lt.s32.totalorder %s22, 1
        %s230 = scalar_select %p229, %s22, 1
        %p231 = scmp.lt.s32.totalorder %s228, 23
        %s232 = scalar_select %p231, %s228, 23
        %s233 = smul.addr %s232, 3
        %s234 = smul.addr %s230, 72
        %s235 = sadd.s32 %s233, %s234
        %s236 = smul.addr %s235, 4
        %s237 = scalar_lea.vmem %s1, %s236
        %p238 = pneg %p83
        %p239 = pneg %p80
        %p240 = pneg %p104
        %p241 = pneg %p101
        %p242 = pneg %p125
        %p243 = pneg %p122
        %p244 = pneg %p153
        %p245 = pneg %p150
        %s246 = sand.u32 %s140, 1
        %s247 = scalar_lea.sflag [#allocation3], %s246
        %s248 = sand.u32 %s140, 1
        %s249 = smul.addr %s248, 32
        %s250 = scalar_lea.vmem [#allocation2], %s249
        %s251 = smul.u32 8, %s23
        %p252 = scmp.lt.s32.totalorder %s22, 1
        %s253 = scalar_select %p252, %s22, 1
        %p254 = scmp.lt.s32.totalorder %s251, 23
        %s255 = scalar_select %p254, %s251, 23
        %s256 = smul.addr %s255, 3
        %s257 = smul.addr %s253, 72
        %s258 = sadd.s32 %s256, %s257
        %s259 = smul.addr %s258, 4
        %s260 = scalar_lea.vmem %s0, %s259
        %s261 = smul.u32 8, %s23
        %s262 = sadd.s32 %s23, 1
        %s263 = smul.u32 8, %s262
        %p264 = scmp.lt.s32.totalorder %s22, 1
        %s265 = scalar_select %p264, %s22, 1
        %p266 = scmp.lt.s32.totalorder %s263, 23
        %s267 = scalar_select %p266, %s263, 23
        %s268 = smul.addr %s267, 3
        %s269 = smul.addr %s265, 72
        %s270 = sadd.s32 %s268, %s269
        %s271 = smul.addr %s270, 4
        %s272 = scalar_lea.vmem %s1, %s271
        %s273 = sadd.s32 %s23, 1
        %s274 = smul.u32 8, %s273
        %s275 = smul.u32 4, %s23
        %v277 = vld [vmem:[%s260] sm:$0xf]
        %v278 = vld [vmem:[%s260 + $0x4] sm:$0xf]
        %v279 = vld [vmem:[%s260 + $0x8] sm:$0x1]
        %v280 = vld [vmem:[%s260 + $0xc] sm:$0xf]
        %v281 = vld [vmem:[%s260 + $0x10] sm:$0xf]
        %v282 = vld [vmem:[%s260 + $0x14] sm:$0x1]
        %v283 = vld [vmem:[%s260 + $0x18] sm:$0xf]
        %v284 = vld [vmem:[%s260 + $0x1c] sm:$0xf]
        %v285 = vld [vmem:[%s260 + $0x20] sm:$0x1]
        %v286 = vld [vmem:[%s260 + $0x24] sm:$0xf]
        %v287 = vld [vmem:[%s260 + $0x28] sm:$0xf]
        %v288 = vld [vmem:[%s260 + $0x2c] sm:$0x1]
        %v289 = vld [vmem:[%s260 + $0x30] sm:$0xf]
        %v290 = vld [vmem:[%s260 + $0x34] sm:$0xf]
        %v291 = vld [vmem:[%s260 + $0x38] sm:$0x1]
        %v292 = vld [vmem:[%s260 + $0x3c] sm:$0xf]
        %v293 = vld [vmem:[%s260 + $0x40] sm:$0xf]
        %v294 = vld [vmem:[%s260 + $0x44] sm:$0x1]
        %v295 = vld [vmem:[%s260 + $0x48] sm:$0xf]
        %v296 = vld [vmem:[%s260 + $0x4c] sm:$0xf]
        %v297 = vld [vmem:[%s260 + $0x50] sm:$0x1]
        %v298 = vld [vmem:[%s260 + $0x54] sm:$0xf]
        %v299 = vld [vmem:[%s260 + $0x58] sm:$0xf]
        %v300 = vld [vmem:[%s260 + $0x5c] sm:$0x1]
        %v301 = vld [vmem:[%s272] sm:$0xf]
        %v302 = vld [vmem:[%s272 + $0x4] sm:$0xf]
        %v303 = vld [vmem:[%s272 + $0x8] sm:$0x1]
        %v304 = vld [vmem:[%s272 + $0xc] sm:$0xf]
        %v305 = vld [vmem:[%s272 + $0x10] sm:$0xf]
        %v306 = vld [vmem:[%s272 + $0x14] sm:$0x1]
        %v307 = vld [vmem:[%s272 + $0x18] sm:$0xf]
        %v308 = vld [vmem:[%s272 + $0x1c] sm:$0xf]
        %v309 = vld [vmem:[%s272 + $0x20] sm:$0x1]
        %v328 = vunpack.c.l.b16 %v277
        %v329 = vunpack.c.l.b16 %v278
        %v330 = vunpack.c.l.b16 %v280
        %v331 = vunpack.c.l.b16 %v281
        %v332 = vunpack.c.l.b16 %v283
        %v333 = vunpack.c.l.b16 %v284
        %v334 = vunpack.c.l.b16 %v286
        %v335 = vunpack.c.l.b16 %v287
        %v336 = vunpack.c.l.b16 %v289
        %v337 = vunpack.c.l.b16 %v290
        %v338 = vunpack.c.l.b16 %v292
        %v339 = vunpack.c.l.b16 %v293
        %v340 = vunpack.c.l.b16 %v295
        %v341 = vunpack.c.l.b16 %v296
        %v342 = vunpack.c.l.b16 %v298
        %v343 = vunpack.c.l.b16 %v299
        %v344 = vunpack.c.l.b16 %v301
        %v345 = vunpack.c.l.b16 %v302
        %v346 = vpack.c.b16 %v329, %v328
        %v347 = vpack.c.b16 %v331, %v330
        %v348 = vpack.c.b16 %v333, %v332
        %v349 = vpack.c.b16 %v335, %v334
        %v350 = vpack.c.b16 %v337, %v336
        %v351 = vpack.c.b16 %v339, %v338
        %v352 = vpack.c.b16 %v341, %v340
        %v353 = vpack.c.b16 %v343, %v342
        %v354 = vpack.c.b16 %v345, %v344
        %v364 = vunpack.c.l.b16 %v279
        %v365 = vunpack.c.l.b16 %v282
        %v366 = vunpack.c.l.b16 %v285
        %v367 = vunpack.c.l.b16 %v288
        %v368 = vunpack.c.l.b16 %v291
        %v369 = vunpack.c.l.b16 %v294
        %v370 = vunpack.c.l.b16 %v297
        %v371 = vunpack.c.l.b16 %v300
        %v372 = vunpack.c.l.b16 %v303
        %v373 = vpack.c.b16 %v364, %v364
        %v374 = vpack.c.b16 %v365, %v365
        %v375 = vpack.c.b16 %v366, %v366
        %v376 = vpack.c.b16 %v367, %v367
        %v377 = vpack.c.b16 %v368, %v368
        %v378 = vpack.c.b16 %v369, %v369
        %v379 = vpack.c.b16 %v370, %v370
        %v380 = vpack.c.b16 %v371, %v371
        %v381 = vpack.c.b16 %v372, %v372
        %vm382 = vsmask.f32 7424
        %v384 = vshrl.u32 %v346, 16
        %v386 = vshll.u32 %v346, 16
        %v388 = vrot.slane %v386, 1
        %v389 = vor.u32 %v384, %v388
        %v391 = vshll.u32 %v373, 16
        %v393 = vrot.slane %v391, 1
        %v394 = vsel %vm382, %v389, %v393
        %v396 = vshrl.u32 %v347, 16
        %v398 = vshll.u32 %v347, 16
        %v400 = vrot.slane %v398, 1
        %v401 = vor.u32 %v396, %v400
        %v403 = vshll.u32 %v374, 16
        %v405 = vrot.slane %v403, 1
        %v406 = vsel %vm382, %v401, %v405
        %v408 = vshrl.u32 %v348, 16
        %v410 = vshll.u32 %v348, 16
        %v412 = vrot.slane %v410, 1
        %v413 = vor.u32 %v408, %v412
        %v415 = vshll.u32 %v375, 16
        %v417 = vrot.slane %v415, 1
        %v418 = vsel %vm382, %v413, %v417
        %v420 = vshrl.u32 %v349, 16
        %v422 = vshll.u32 %v349, 16
        %v424 = vrot.slane %v422, 1
        %v425 = vor.u32 %v420, %v424
        %v427 = vshll.u32 %v376, 16
        %v429 = vrot.slane %v427, 1
        %v430 = vsel %vm382, %v425, %v429
        %v432 = vshrl.u32 %v350, 16
        %v434 = vshll.u32 %v350, 16
        %v436 = vrot.slane %v434, 1
        %v437 = vor.u32 %v432, %v436
        %v439 = vshll.u32 %v377, 16
        %v441 = vrot.slane %v439, 1
        %v442 = vsel %vm382, %v437, %v441
        %v444 = vshrl.u32 %v351, 16
        %v446 = vshll.u32 %v351, 16
        %v448 = vrot.slane %v446, 1
        %v449 = vor.u32 %v444, %v448
        %v451 = vshll.u32 %v378, 16
        %v453 = vrot.slane %v451, 1
        %v454 = vsel %vm382, %v449, %v453
        %v456 = vshrl.u32 %v352, 16
        %v458 = vshll.u32 %v352, 16
        %v460 = vrot.slane %v458, 1
        %v461 = vor.u32 %v456, %v460
        %v463 = vshll.u32 %v379, 16
        %v465 = vrot.slane %v463, 1
        %v466 = vsel %vm382, %v461, %v465
        %v468 = vshrl.u32 %v353, 16
        %v470 = vshll.u32 %v353, 16
        %v472 = vrot.slane %v470, 1
        %v473 = vor.u32 %v468, %v472
        %v475 = vshll.u32 %v380, 16
        %v477 = vrot.slane %v475, 1
        %v478 = vsel %vm382, %v473, %v477
        %v480 = vshrl.u32 %v354, 16
        %v482 = vshll.u32 %v354, 16
        %v484 = vrot.slane %v482, 1
        %v485 = vor.u32 %v480, %v484
        %v487 = vshll.u32 %v381, 16
        %v489 = vrot.slane %v487, 1
        %v490 = vsel %vm382, %v485, %v489
        %491 = vrot.lane.b32.xlu0 %v394, 4
        %v492 = vpop.permute.xlu0 %491
        %493 = vrot.lane.b32.xlu0 %v406, 4
        %v494 = vpop.permute.xlu0 %493
        %495 = vrot.lane.b32.xlu0 %v418, 4
        %v496 = vpop.permute.xlu0 %495
        %497 = vrot.lane.b32.xlu0 %v430, 4
        %v498 = vpop.permute.xlu0 %497
        %499 = vrot.lane.b32.xlu0 %v442, 4
        %v500 = vpop.permute.xlu0 %499
        %501 = vrot.lane.b32.xlu0 %v454, 4
        %v502 = vpop.permute.xlu0 %501
        %503 = vrot.lane.b32.xlu0 %v466, 4
        %v504 = vpop.permute.xlu0 %503
        %505 = vrot.lane.b32.xlu0 %v478, 4
        %v506 = vpop.permute.xlu0 %505
        %507 = vrot.lane.b32.xlu0 %v490, 4
        %v508 = vpop.permute.xlu0 %507
        %vm509 = vcmask 1046528
        %v510 = vrot.slane %v346, 1
        %v511 = vrot.slane %v373, 1
        %v512 = vsel %vm509, %v510, %v511
        %v513 = vrot.slane %v347, 1
        %v514 = vrot.slane %v374, 1
        %v515 = vsel %vm509, %v513, %v514
        %v516 = vrot.slane %v348, 1
        %v517 = vrot.slane %v375, 1
        %v518 = vsel %vm509, %v516, %v517
        %v519 = vrot.slane %v349, 1
        %v520 = vrot.slane %v376, 1
        %v521 = vsel %vm509, %v519, %v520
        %v522 = vrot.slane %v350, 1
        %v523 = vrot.slane %v377, 1
        %v524 = vsel %vm509, %v522, %v523
        %v525 = vrot.slane %v351, 1
        %v526 = vrot.slane %v378, 1
        %v527 = vsel %vm509, %v525, %v526
        %v528 = vrot.slane %v352, 1
        %v529 = vrot.slane %v379, 1
        %v530 = vsel %vm509, %v528, %v529
        %v531 = vrot.slane %v353, 1
        %v532 = vrot.slane %v380, 1
        %v533 = vsel %vm509, %v531, %v532
        %v534 = vrot.slane %v354, 1
        %v535 = vrot.slane %v381, 1
        %v536 = vsel %vm509, %v534, %v535
        %537 = vrot.lane.b32.xlu0 %v512, 8
        %v538 = vpop.permute.xlu0 %537
        %539 = vrot.lane.b32.xlu0 %v515, 8
        %v540 = vpop.permute.xlu0 %539
        %541 = vrot.lane.b32.xlu0 %v518, 8
        %v542 = vpop.permute.xlu0 %541
        %543 = vrot.lane.b32.xlu0 %v521, 8
        %v544 = vpop.permute.xlu0 %543
        %545 = vrot.lane.b32.xlu0 %v524, 8
        %v546 = vpop.permute.xlu0 %545
        %547 = vrot.lane.b32.xlu0 %v527, 8
        %v548 = vpop.permute.xlu0 %547
        %549 = vrot.lane.b32.xlu0 %v530, 8
        %v550 = vpop.permute.xlu0 %549
        %551 = vrot.lane.b32.xlu0 %v533, 8
        %v552 = vpop.permute.xlu0 %551
        %553 = vrot.lane.b32.xlu0 %v536, 8
        %v554 = vpop.permute.xlu0 %553
        %v557 = vunpack.c.l.b16 %v304
        %v558 = vunpack.c.l.b16 %v305
        %v559 = vpack.c.b16 %v558, %v557
        %560 = vrot.lane.b32.xlu0 %v347, 12
        %v561 = vpop.permute.xlu0 %560
        %562 = vrot.lane.b32.xlu0 %v348, 12
        %v563 = vpop.permute.xlu0 %562
        %564 = vrot.lane.b32.xlu0 %v349, 12
        %v565 = vpop.permute.xlu0 %564
        %566 = vrot.lane.b32.xlu0 %v350, 12
        %v567 = vpop.permute.xlu0 %566
        %568 = vrot.lane.b32.xlu0 %v351, 12
        %v569 = vpop.permute.xlu0 %568
        %570 = vrot.lane.b32.xlu0 %v352, 12
        %v571 = vpop.permute.xlu0 %570
        %572 = vrot.lane.b32.xlu0 %v353, 12
        %v573 = vpop.permute.xlu0 %572
        %574 = vrot.lane.b32.xlu0 %v354, 12
        %v575 = vpop.permute.xlu0 %574
        %576 = vrot.lane.b32.xlu0 %v559, 12
        %v577 = vpop.permute.xlu0 %576
        %v579 = vunpack.c.l.b16 %v306
        %v580 = vpack.c.b16 %v579, %v579
        %v582 = vshrl.u32 %v559, 16
        %v584 = vshll.u32 %v559, 16
        %v586 = vrot.slane %v584, 1
        %v587 = vor.u32 %v582, %v586
        %v589 = vshll.u32 %v580, 16
        %v591 = vrot.slane %v589, 1
        %v592 = vsel %vm382, %v587, %v591
        %593 = vrot.lane.b32.xlu0 %v406, 16
        %v594 = vpop.permute.xlu0 %593
        %595 = vrot.lane.b32.xlu0 %v418, 16
        %v596 = vpop.permute.xlu0 %595
        %597 = vrot.lane.b32.xlu0 %v430, 16
        %v598 = vpop.permute.xlu0 %597
        %599 = vrot.lane.b32.xlu0 %v442, 16
        %v600 = vpop.permute.xlu0 %599
        %601 = vrot.lane.b32.xlu0 %v454, 16
        %v602 = vpop.permute.xlu0 %601
        %603 = vrot.lane.b32.xlu0 %v466, 16
        %v604 = vpop.permute.xlu0 %603
        %605 = vrot.lane.b32.xlu0 %v478, 16
        %v606 = vpop.permute.xlu0 %605
        %607 = vrot.lane.b32.xlu0 %v490, 16
        %v608 = vpop.permute.xlu0 %607
        %609 = vrot.lane.b32.xlu0 %v592, 16
        %v610 = vpop.permute.xlu0 %609
        %v611 = vrot.slane %v559, 1
        %v612 = vrot.slane %v580, 1
        %v613 = vsel %vm509, %v611, %v612
        %614 = vrot.lane.b32.xlu0 %v515, 20
        %v615 = vpop.permute.xlu0 %614
        %616 = vrot.lane.b32.xlu0 %v518, 20
        %v617 = vpop.permute.xlu0 %616
        %618 = vrot.lane.b32.xlu0 %v521, 20
        %v619 = vpop.permute.xlu0 %618
        %620 = vrot.lane.b32.xlu0 %v524, 20
        %v621 = vpop.permute.xlu0 %620
        %622 = vrot.lane.b32.xlu0 %v527, 20
        %v623 = vpop.permute.xlu0 %622
        %624 = vrot.lane.b32.xlu0 %v530, 20
        %v625 = vpop.permute.xlu0 %624
        %626 = vrot.lane.b32.xlu0 %v533, 20
        %v627 = vpop.permute.xlu0 %626
        %628 = vrot.lane.b32.xlu0 %v536, 20
        %v629 = vpop.permute.xlu0 %628
        %630 = vrot.lane.b32.xlu0 %v613, 20
        %v631 = vpop.permute.xlu0 %630
        %v634 = vunpack.c.l.b16 %v307
        %v635 = vunpack.c.l.b16 %v308
        %v636 = vpack.c.b16 %v635, %v634
        %637 = vrot.lane.b32.xlu0 %v348, 24
        %v638 = vpop.permute.xlu0 %637
        %639 = vrot.lane.b32.xlu0 %v349, 24
        %v640 = vpop.permute.xlu0 %639
        %641 = vrot.lane.b32.xlu0 %v350, 24
        %v642 = vpop.permute.xlu0 %641
        %643 = vrot.lane.b32.xlu0 %v351, 24
        %v644 = vpop.permute.xlu0 %643
        %645 = vrot.lane.b32.xlu0 %v352, 24
        %v646 = vpop.permute.xlu0 %645
        %647 = vrot.lane.b32.xlu0 %v353, 24
        %v648 = vpop.permute.xlu0 %647
        %649 = vrot.lane.b32.xlu0 %v354, 24
        %v650 = vpop.permute.xlu0 %649
        %651 = vrot.lane.b32.xlu0 %v559, 24
        %v652 = vpop.permute.xlu0 %651
        %653 = vrot.lane.b32.xlu0 %v636, 24
        %v654 = vpop.permute.xlu0 %653
        %v656 = vunpack.c.l.b16 %v309
        %v657 = vpack.c.b16 %v656, %v656
        %v659 = vshrl.u32 %v636, 16
        %v661 = vshll.u32 %v636, 16
        %v663 = vrot.slane %v661, 1
        %v664 = vor.u32 %v659, %v663
        %v666 = vshll.u32 %v657, 16
        %v668 = vrot.slane %v666, 1
        %v669 = vsel %vm382, %v664, %v668
        %670 = vrot.lane.b32.xlu0 %v418, 28
        %v671 = vpop.permute.xlu0 %670
        %672 = vrot.lane.b32.xlu0 %v430, 28
        %v673 = vpop.permute.xlu0 %672
        %674 = vrot.lane.b32.xlu0 %v442, 28
        %v675 = vpop.permute.xlu0 %674
        %676 = vrot.lane.b32.xlu0 %v454, 28
        %v677 = vpop.permute.xlu0 %676
        %678 = vrot.lane.b32.xlu0 %v466, 28
        %v679 = vpop.permute.xlu0 %678
        %680 = vrot.lane.b32.xlu0 %v478, 28
        %v681 = vpop.permute.xlu0 %680
        %682 = vrot.lane.b32.xlu0 %v490, 28
        %v683 = vpop.permute.xlu0 %682
        %684 = vrot.lane.b32.xlu0 %v592, 28
        %v685 = vpop.permute.xlu0 %684
        %686 = vrot.lane.b32.xlu0 %v669, 28
        %v687 = vpop.permute.xlu0 %686
        %v688 = vrot.slane %v636, 1
        %v689 = vrot.slane %v657, 1
        %v690 = vsel %vm509, %v688, %v689
        %691 = vrot.lane.b32.xlu0 %v518, 32
        %v692 = vpop.permute.xlu0 %691
        %693 = vrot.lane.b32.xlu0 %v521, 32
        %v694 = vpop.permute.xlu0 %693
        %695 = vrot.lane.b32.xlu0 %v524, 32
        %v696 = vpop.permute.xlu0 %695
        %697 = vrot.lane.b32.xlu0 %v527, 32
        %v698 = vpop.permute.xlu0 %697
        %699 = vrot.lane.b32.xlu0 %v530, 32
        %v700 = vpop.permute.xlu0 %699
        %701 = vrot.lane.b32.xlu0 %v533, 32
        %v702 = vpop.permute.xlu0 %701
        %703 = vrot.lane.b32.xlu0 %v536, 32
        %v704 = vpop.permute.xlu0 %703
        %705 = vrot.lane.b32.xlu0 %v613, 32
        %v706 = vpop.permute.xlu0 %705
        %707 = vrot.lane.b32.xlu0 %v690, 32
        %v708 = vpop.permute.xlu0 %707
        %vm709 = vcmask 31744
        %v711 = vsel %vm709, %v346, %v492
        %v713 = vsel %vm709, %v347, %v494
        %v715 = vsel %vm709, %v348, %v496
        %v717 = vsel %vm709, %v349, %v498
        %v719 = vsel %vm709, %v350, %v500
        %v721 = vsel %vm709, %v351, %v502
        %v723 = vsel %vm709, %v352, %v504
        %v725 = vsel %vm709, %v353, %v506
        %v727 = vsel %vm709, %v354, %v508
        %vm728 = vcmask 64512
        %v730 = vsel %vm728, %v711, %v538
        %v732 = vsel %vm728, %v713, %v540
        %v734 = vsel %vm728, %v715, %v542
        %v736 = vsel %vm728, %v717, %v544
        %v738 = vsel %vm728, %v719, %v546
        %v740 = vsel %vm728, %v721, %v548
        %v742 = vsel %vm728, %v723, %v550
        %v744 = vsel %vm728, %v725, %v552
        %v746 = vsel %vm728, %v727, %v554
        %vm747 = vcmask 97280
        %v749 = vsel %vm747, %v730, %v561
        %v751 = vsel %vm747, %v732, %v563
        %v753 = vsel %vm747, %v734, %v565
        %v755 = vsel %vm747, %v736, %v567
        %v757 = vsel %vm747, %v738, %v569
        %v759 = vsel %vm747, %v740, %v571
        %v761 = vsel %vm747, %v742, %v573
        %v763 = vsel %vm747, %v744, %v575
        %v765 = vsel %vm747, %v746, %v577
        %vm766 = vcmask 130048
        %v768 = vsel %vm766, %v749, %v594
        %v770 = vsel %vm766, %v751, %v596
        %v772 = vsel %vm766, %v753, %v598
        %v774 = vsel %vm766, %v755, %v600
        %v776 = vsel %vm766, %v757, %v602
        %v778 = vsel %vm766, %v759, %v604
        %v780 = vsel %vm766, %v761, %v606
        %v782 = vsel %vm766, %v763, %v608
        %v784 = vsel %vm766, %v765, %v610
        %vm785 = vcmask 162816
        %v787 = vsel %vm785, %v768, %v615
        %v789 = vsel %vm785, %v770, %v617
        %v791 = vsel %vm785, %v772, %v619
        %v793 = vsel %vm785, %v774, %v621
        %v795 = vsel %vm785, %v776, %v623
        %v797 = vsel %vm785, %v778, %v625
        %v799 = vsel %vm785, %v780, %v627
        %v801 = vsel %vm785, %v782, %v629
        %v803 = vsel %vm785, %v784, %v631
        %vm804 = vcmask 195584
        %v806 = vsel %vm804, %v787, %v638
        %v808 = vsel %vm804, %v789, %v640
        %v810 = vsel %vm804, %v791, %v642
        %v812 = vsel %vm804, %v793, %v644
        %v814 = vsel %vm804, %v795, %v646
        %v816 = vsel %vm804, %v797, %v648
        %v818 = vsel %vm804, %v799, %v650
        %v820 = vsel %vm804, %v801, %v652
        %v822 = vsel %vm804, %v803, %v654
        %vm823 = vcmask 228352
        %v825 = vsel %vm823, %v806, %v671
        %v827 = vsel %vm823, %v808, %v673
        %v829 = vsel %vm823, %v810, %v675
        %v831 = vsel %vm823, %v812, %v677
        %v833 = vsel %vm823, %v814, %v679
        %v835 = vsel %vm823, %v816, %v681
        %v837 = vsel %vm823, %v818, %v683
        %v839 = vsel %vm823, %v820, %v685
        %v841 = vsel %vm823, %v822, %v687
        %vm842 = vcmask 261120
        %v844 = vsel %vm842, %v825, %v692
        %v846 = vsel %vm842, %v827, %v694
        %v848 = vsel %vm842, %v829, %v696
        %v850 = vsel %vm842, %v831, %v698
        %v852 = vsel %vm842, %v833, %v700
        %v854 = vsel %vm842, %v835, %v702
        %v856 = vsel %vm842, %v837, %v704
        %v858 = vsel %vm842, %v839, %v706
        %v860 = vsel %vm842, %v841, %v708
        %v861 = vld [vmem:[%s2] sm:$0xf]
        %v862 = vld [vmem:[%s2 + $0x4] sm:$0xf]
        %v863 = vld [vmem:[%s2 + $0x8] sm:$0xf]
        %v864 = vld [vmem:[%s2 + $0xc] sm:$0xf]
        %v865 = vld [vmem:[%s2 + $0x10] sm:$0x3]
        %v866 = vld [vmem:[%s3] sm:$0x1]
        %v868 = vlaneseq
        %v869 = vshrl.u32 %v868, 7
        %v870 = vsub.s32 0, %v869
        %v871 = vrot.slane %v866, %v870
        %v878 = vunpack.c.l.b16 %v861
        %v879 = vunpack.c.l.b16 %v862
        %v880 = vunpack.c.l.b16 %v863
        %v881 = vunpack.c.l.b16 %v864
        %v882 = vunpack.c.l.b16 %v865
        %v883 = vpack.c.b16 %v879, %v878
        %v884 = vpack.c.b16 %v881, %v880
        %v885 = vpack.c.b16 %v882, %v882
        %vm888 = vcmask 293888
        %v889 = vsel %vm888, %v844, 0
        %v891 = vsel %vm888, %v846, 0
        %v893 = vsel %vm888, %v848, 0
        %v895 = vsel %vm888, %v850, 0
        %v897 = vsel %vm888, %v852, 0
        %v899 = vsel %vm888, %v854, 0
        %v901 = vsel %vm888, %v856, 0
        %v903 = vsel %vm888, %v858, 0
        %v905 = vsel %vm888, %v860, 0
        %vm907 = vcmask 1041408
        %v909 = vsel %vm907, %v885, 0
        %911 = vmatprep.subr.bf16.mxu0 0
        %912 = vmatpush1.bf16.msra.mxu0 %v883
        %913 = vmatprep.subr.bf16.mxu0 0
        %914 = vmatpush1.bf16.msra.mxu0 %v884
        %915 = vmatprep.subr.bf16.mxu0 0
        %916 = vmatpush1.bf16.msra.mxu0 %v909
        %917 = vmatprep.subr.bf16.mxu0 0
        %918 = vmatpush1.bf16.msra.mxu0 0
        %919 = vmatprep.subr.bf16.mxu0 0
        %920 = vmatpush1.bf16.msra.mxu0 0
        %921 = vmatprep.subr.bf16.mxu0 0
        %922 = vmatpush1.bf16.msra.mxu0 0
        %923 = vmatprep.subr.bf16.mxu0 0
        %924 = vmatpush1.bf16.msra.mxu0 0
        %925 = vmatprep.subr.bf16.mxu0 0
        %926 = vmatpush1.bf16.msra.mxu0 0
        %927 = vmatprep.subr.bf16.mxu0 0
        %928 = vmatpush1.bf16.msra.mxu0 0
        %929 = vmatprep.subr.bf16.mxu0 0
        %930 = vmatpush1.bf16.msra.mxu0 0
        %931 = vmatprep.subr.bf16.mxu0 0
        %932 = vmatpush1.bf16.msra.mxu0 0
        %933 = vmatprep.subr.bf16.mxu0 0
        %934 = vmatpush1.bf16.msra.mxu0 0
        %935 = vmatprep.subr.bf16.mxu0 0
        %936 = vmatpush1.bf16.msra.mxu0 0
        %937 = vmatprep.subr.bf16.mxu0 0
        %938 = vmatpush1.bf16.msra.mxu0 0
        %939 = vmatprep.subr.bf16.mxu0 0
        %940 = vmatpush1.bf16.msra.mxu0 0
        %941 = vmatprep.subr.bf16.mxu0 0
        %942 = vmatpush1.bf16.msra.mxu0 0
        %943 = vmatprep.mubr.bf16.mxu0 0
        %944 = vmatmul.mubr.bf16.gmra.mrb[0].mxu0 %v889
        %v945 = vpop.f32.mrb[0].mxu0
        %v946 = vadd.f32 %v871, %v945
        %v947 = vpop.f32.mrb[0].mxu0
        %v948 = vpop.f32.mrb[0].mxu0
        %v949 = vadd.f32 %v871, %v948
        %v950 = vpop.f32.mrb[0].mxu0
        %951 = vmatprep.mubr.bf16.mxu0 0
        %952 = vmatmul.mubr.bf16.gmra.mrb[0].mxu0 %v891
        %v953 = vpop.f32.mrb[0].mxu0
        %v954 = vadd.f32 %v871, %v953
        %v955 = vpop.f32.mrb[0].mxu0
        %v956 = vpop.f32.mrb[0].mxu0
        %v957 = vadd.f32 %v871, %v956
        %v958 = vpop.f32.mrb[0].mxu0
        %959 = vmatprep.mubr.bf16.mxu0 0
        %960 = vmatmul.mubr.bf16.gmra.mrb[0].mxu0 %v893
        %v961 = vpop.f32.mrb[0].mxu0
        %v962 = vadd.f32 %v871, %v961
        %v963 = vpop.f32.mrb[0].mxu0
        %v964 = vpop.f32.mrb[0].mxu0
        %v965 = vadd.f32 %v871, %v964
        %v966 = vpop.f32.mrb[0].mxu0
        %967 = vmatprep.mubr.bf16.mxu0 0
        %968 = vmatmul.mubr.bf16.gmra.mrb[0].mxu0 %v895
        %v969 = vpop.f32.mrb[0].mxu0
        %v970 = vadd.f32 %v871, %v969
        %v971 = vpop.f32.mrb[0].mxu0
        %v972 = vpop.f32.mrb[0].mxu0
        %v973 = vadd.f32 %v871, %v972
        %v974 = vpop.f32.mrb[0].mxu0
        %975 = vmatprep.mubr.bf16.mxu0 0
        %976 = vmatmul.mubr.bf16.gmra.mrb[0].mxu0 %v897
        %v977 = vpop.f32.mrb[0].mxu0
        %v978 = vadd.f32 %v871, %v977
        %v979 = vpop.f32.mrb[0].mxu0
        %v980 = vpop.f32.mrb[0].mxu0
        %v981 = vadd.f32 %v871, %v980
        %v982 = vpop.f32.mrb[0].mxu0
        %983 = vmatprep.mubr.bf16.mxu0 0
        %984 = vmatmul.mubr.bf16.gmra.mrb[0].mxu0 %v899
        %v985 = vpop.f32.mrb[0].mxu0
        %v986 = vadd.f32 %v871, %v985
        %v987 = vpop.f32.mrb[0].mxu0
        %v988 = vpop.f32.mrb[0].mxu0
        %v989 = vadd.f32 %v871, %v988
        %v990 = vpop.f32.mrb[0].mxu0
        %991 = vmatprep.mubr.bf16.mxu0 0
        %992 = vmatmul.mubr.bf16.gmra.mrb[0].mxu0 %v901
        %v993 = vpop.f32.mrb[0].mxu0
        %v994 = vadd.f32 %v871, %v993
        %v995 = vpop.f32.mrb[0].mxu0
        %v996 = vpop.f32.mrb[0].mxu0
        %v997 = vadd.f32 %v871, %v996
        %v998 = vpop.f32.mrb[0].mxu0
        %999 = vmatprep.mubr.bf16.mxu0 0
        %1000 = vmatmul.mubr.bf16.gmra.mrb[0].mxu0 %v903
        %v1001 = vpop.f32.mrb[0].mxu0
        %v1002 = vadd.f32 %v871, %v1001
        %v1003 = vpop.f32.mrb[0].mxu0
        %v1004 = vpop.f32.mrb[0].mxu0
        %v1005 = vadd.f32 %v871, %v1004
        %v1006 = vpop.f32.mrb[0].mxu0
        %1007 = vmatprep.mubr.bf16.mxu0 0
        %1008 = vmatmul.mubr.bf16.gmra.mrb[0].mxu0 %v905
        %v1009 = vpop.f32.mrb[0].mxu0
        %v1010 = vadd.f32 %v871, %v1009
        %v1011 = vpop.f32.mrb[0].mxu0
        %v1012 = vpop.f32.mrb[0].mxu0
        %v1013 = vadd.f32 %v871, %v1012
        %v1014 = vpop.f32.mrb[0].mxu0
        %1015 = vdwg.mxu0
        %v1016 = vmax.f32 %v946, 0.0
        %v1017 = vmax.f32 %v949, 0.0
        %v1018 = vmax.f32 %v954, 0.0
        %v1019 = vmax.f32 %v957, 0.0
        %v1020 = vmax.f32 %v962, 0.0
        %v1021 = vmax.f32 %v965, 0.0
        %v1022 = vmax.f32 %v970, 0.0
        %v1023 = vmax.f32 %v973, 0.0
        %v1024 = vmax.f32 %v978, 0.0
        %v1025 = vmax.f32 %v981, 0.0
        %v1026 = vmax.f32 %v986, 0.0
        %v1027 = vmax.f32 %v989, 0.0
        %v1028 = vmax.f32 %v994, 0.0
        %v1029 = vmax.f32 %v997, 0.0
        %v1030 = vmax.f32 %v1002, 0.0
        %v1031 = vmax.f32 %v1005, 0.0
        %v1032 = vmax.f32 %v1010, 0.0
        %v1033 = vmax.f32 %v1013, 0.0
        %p1034 = scmp.eq.s32.totalorder %s23, 0
        %s1035 = scalar_select %p1034, 1, 0
        %v1036 = vstv %s1035
        %vm1037 = vcmp.eq.s32.totalorder %v1036, 1
        %v1038 = vsel %vm1037, 1, 0
        %vm1039 = vcmp.eq.s32.totalorder %v1038, 1
        %v1040 = vsel %vm1039, 0.0, %v1016
        %v1041 = vsel %vm1039, 0.0, %v1017
        %v1042 = vsel 0, 0.0, %v1018
        %v1043 = vsel 0, 0.0, %v1019
        %v1044 = vsel 0, 0.0, %v1020
        %v1045 = vsel 0, 0.0, %v1021
        %v1046 = vsel 0, 0.0, %v1022
        %v1047 = vsel 0, 0.0, %v1023
        %v1048 = vsel 0, 0.0, %v1024
        %v1049 = vsel 0, 0.0, %v1025
        %v1050 = vsel 0, 0.0, %v1026
        %v1051 = vsel 0, 0.0, %v1027
        %v1052 = vsel 0, 0.0, %v1028
        %v1053 = vsel 0, 0.0, %v1029
        %v1054 = vsel 0, 0.0, %v1030
        %v1055 = vsel 0, 0.0, %v1031
        %v1056 = vsel 0, 0.0, %v1032
        %v1057 = vsel 0, 0.0, %v1033
        %v1058 = vmax.f32 %v1040, %v1042
        %v1059 = vmax.f32 %v1041, %v1043
        %v1060 = vmax.f32 %v1044, %v1046
        %v1061 = vmax.f32 %v1045, %v1047
        %v1062 = vmax.f32 %v1048, %v1050
        %v1063 = vmax.f32 %v1049, %v1051
        %v1064 = vmax.f32 %v1052, %v1054
        %v1065 = vmax.f32 %v1053, %v1055
        %v1066 = vmax.f32 %v1058, %v1044
        %v1067 = vmax.f32 %v1059, %v1045
        %v1068 = vmax.f32 %v1060, %v1048
        %v1069 = vmax.f32 %v1061, %v1049
        %v1070 = vmax.f32 %v1062, %v1052
        %v1071 = vmax.f32 %v1063, %v1053
        %v1072 = vmax.f32 %v1064, %v1056
        %v1073 = vmax.f32 %v1065, %v1057
        %v1082 = vcombine.high %v1066, %v1066
        %v1084 = vunpack.c.l.s4 1983009808
        %v1085 = vunpack.c.0.s8 %v1084
        %v1086 = vlaneseq
        %v1087 = vshrl.u32 %v1086, 7
        %v1088 = vsub.s32 %v1085, %v1087
        %v1089 = vrot.slane %v1066, %v1088
        %v1091 = vunpack.c.l.s4 1983009808
        %v1092 = vunpack.c.0.s8 %v1091
        %v1093 = vlaneseq
        %v1094 = vshrl.u32 %v1093, 7
        %v1095 = vsub.s32 %v1092, %v1094
        %v1096 = vrot.slane %v1082, %v1095
        %v1097 = vcombine.high %v1089, %v1089
        %v1098 = vcombine.high %v1096, %v1096
        %v1099 = vcombine.high %v1067, %v1067
        %v1101 = vunpack.c.l.s4 1983009808
        %v1102 = vunpack.c.0.s8 %v1101
        %v1103 = vlaneseq
        %v1104 = vshrl.u32 %v1103, 7
        %v1105 = vsub.s32 %v1102, %v1104
        %v1106 = vrot.slane %v1067, %v1105
        %v1108 = vunpack.c.l.s4 1983009808
        %v1109 = vunpack.c.0.s8 %v1108
        %v1110 = vlaneseq
        %v1111 = vshrl.u32 %v1110, 7
        %v1112 = vsub.s32 %v1109, %v1111
        %v1113 = vrot.slane %v1099, %v1112
        %v1114 = vcombine.high %v1106, %v1106
        %v1115 = vcombine.high %v1113, %v1113
        %v1116 = vcombine.high %v1068, %v1068
        %v1118 = vunpack.c.l.s4 1983009808
        %v1119 = vunpack.c.0.s8 %v1118
        %v1120 = vlaneseq
        %v1121 = vshrl.u32 %v1120, 7
        %v1122 = vsub.s32 %v1119, %v1121
        %v1123 = vrot.slane %v1068, %v1122
        %v1125 = vunpack.c.l.s4 1983009808
        %v1126 = vunpack.c.0.s8 %v1125
        %v1127 = vlaneseq
        %v1128 = vshrl.u32 %v1127, 7
        %v1129 = vsub.s32 %v1126, %v1128
        %v1130 = vrot.slane %v1116, %v1129
        %v1131 = vcombine.high %v1123, %v1123
        %v1132 = vcombine.high %v1130, %v1130
        %v1133 = vcombine.high %v1069, %v1069
        %v1135 = vunpack.c.l.s4 1983009808
        %v1136 = vunpack.c.0.s8 %v1135
        %v1137 = vlaneseq
        %v1138 = vshrl.u32 %v1137, 7
        %v1139 = vsub.s32 %v1136, %v1138
        %v1140 = vrot.slane %v1069, %v1139
        %v1142 = vunpack.c.l.s4 1983009808
        %v1143 = vunpack.c.0.s8 %v1142
        %v1144 = vlaneseq
        %v1145 = vshrl.u32 %v1144, 7
        %v1146 = vsub.s32 %v1143, %v1145
        %v1147 = vrot.slane %v1133, %v1146
        %v1148 = vcombine.high %v1140, %v1140
        %v1149 = vcombine.high %v1147, %v1147
        %v1150 = vcombine.high %v1070, %v1070
        %v1152 = vunpack.c.l.s4 1983009808
        %v1153 = vunpack.c.0.s8 %v1152
        %v1154 = vlaneseq
        %v1155 = vshrl.u32 %v1154, 7
        %v1156 = vsub.s32 %v1153, %v1155
        %v1157 = vrot.slane %v1070, %v1156
        %v1159 = vunpack.c.l.s4 1983009808
        %v1160 = vunpack.c.0.s8 %v1159
        %v1161 = vlaneseq
        %v1162 = vshrl.u32 %v1161, 7
        %v1163 = vsub.s32 %v1160, %v1162
        %v1164 = vrot.slane %v1150, %v1163
        %v1165 = vcombine.high %v1157, %v1157
        %v1166 = vcombine.high %v1164, %v1164
        %v1167 = vcombine.high %v1071, %v1071
        %v1169 = vunpack.c.l.s4 1983009808
        %v1170 = vunpack.c.0.s8 %v1169
        %v1171 = vlaneseq
        %v1172 = vshrl.u32 %v1171, 7
        %v1173 = vsub.s32 %v1170, %v1172
        %v1174 = vrot.slane %v1071, %v1173
        %v1176 = vunpack.c.l.s4 1983009808
        %v1177 = vunpack.c.0.s8 %v1176
        %v1178 = vlaneseq
        %v1179 = vshrl.u32 %v1178, 7
        %v1180 = vsub.s32 %v1177, %v1179
        %v1181 = vrot.slane %v1167, %v1180
        %v1182 = vcombine.high %v1174, %v1174
        %v1183 = vcombine.high %v1181, %v1181
        %v1184 = vcombine.high %v1072, %v1072
        %v1186 = vunpack.c.l.s4 1983009808
        %v1187 = vunpack.c.0.s8 %v1186
        %v1188 = vlaneseq
        %v1189 = vshrl.u32 %v1188, 7
        %v1190 = vsub.s32 %v1187, %v1189
        %v1191 = vrot.slane %v1072, %v1190
        %v1193 = vunpack.c.l.s4 1983009808
        %v1194 = vunpack.c.0.s8 %v1193
        %v1195 = vlaneseq
        %v1196 = vshrl.u32 %v1195, 7
        %v1197 = vsub.s32 %v1194, %v1196
        %v1198 = vrot.slane %v1184, %v1197
        %v1199 = vcombine.high %v1191, %v1191
        %v1200 = vcombine.high %v1198, %v1198
        %v1201 = vcombine.high %v1073, %v1073
        %v1203 = vunpack.c.l.s4 1983009808
        %v1204 = vunpack.c.0.s8 %v1203
        %v1205 = vlaneseq
        %v1206 = vshrl.u32 %v1205, 7
        %v1207 = vsub.s32 %v1204, %v1206
        %v1208 = vrot.slane %v1073, %v1207
        %v1210 = vunpack.c.l.s4 1983009808
        %v1211 = vunpack.c.0.s8 %v1210
        %v1212 = vlaneseq
        %v1213 = vshrl.u32 %v1212, 7
        %v1214 = vsub.s32 %v1211, %v1213
        %v1215 = vrot.slane %v1201, %v1214
        %v1216 = vcombine.high %v1208, %v1208
        %v1217 = vcombine.high %v1215, %v1215
        %v1250 = vrot.slane %v1089, 7
        %v1251 = vrot.slane %v1250, 2
        %v1252 = vrot.slane %v1097, 7
        %v1253 = vrot.slane %v1252, 2
        %v1254 = vrot.slane %v1096, 7
        %v1255 = vrot.slane %v1254, 2
        %v1256 = vrot.slane %v1098, 7
        %v1257 = vrot.slane %v1256, 2
        %v1258 = vrot.slane %v1106, 7
        %v1259 = vrot.slane %v1258, 2
        %v1260 = vrot.slane %v1114, 7
        %v1261 = vrot.slane %v1260, 2
        %v1262 = vrot.slane %v1113, 7
        %v1263 = vrot.slane %v1262, 2
        %v1264 = vrot.slane %v1115, 7
        %v1265 = vrot.slane %v1264, 2
        %v1266 = vrot.slane %v1123, 7
        %v1267 = vrot.slane %v1266, 2
        %v1268 = vrot.slane %v1131, 7
        %v1269 = vrot.slane %v1268, 2
        %v1270 = vrot.slane %v1130, 7
        %v1271 = vrot.slane %v1270, 2
        %v1272 = vrot.slane %v1132, 7
        %v1273 = vrot.slane %v1272, 2
        %v1274 = vrot.slane %v1140, 7
        %v1275 = vrot.slane %v1274, 2
        %v1276 = vrot.slane %v1148, 7
        %v1277 = vrot.slane %v1276, 2
        %v1278 = vrot.slane %v1147, 7
        %v1279 = vrot.slane %v1278, 2
        %v1280 = vrot.slane %v1149, 7
        %v1281 = vrot.slane %v1280, 2
        %v1282 = vrot.slane %v1157, 7
        %v1283 = vrot.slane %v1282, 2
        %v1284 = vrot.slane %v1165, 7
        %v1285 = vrot.slane %v1284, 2
        %v1286 = vrot.slane %v1164, 7
        %v1287 = vrot.slane %v1286, 2
        %v1288 = vrot.slane %v1166, 7
        %v1289 = vrot.slane %v1288, 2
        %v1290 = vrot.slane %v1174, 7
        %v1291 = vrot.slane %v1290, 2
        %v1292 = vrot.slane %v1182, 7
        %v1293 = vrot.slane %v1292, 2
        %v1294 = vrot.slane %v1181, 7
        %v1295 = vrot.slane %v1294, 2
        %v1296 = vrot.slane %v1183, 7
        %v1297 = vrot.slane %v1296, 2
        %v1298 = vrot.slane %v1191, 7
        %v1299 = vrot.slane %v1298, 2
        %v1300 = vrot.slane %v1199, 7
        %v1301 = vrot.slane %v1300, 2
        %v1302 = vrot.slane %v1198, 7
        %v1303 = vrot.slane %v1302, 2
        %v1304 = vrot.slane %v1200, 7
        %v1305 = vrot.slane %v1304, 2
        %v1306 = vrot.slane %v1208, 7
        %v1307 = vrot.slane %v1306, 2
        %v1308 = vrot.slane %v1216, 7
        %v1309 = vrot.slane %v1308, 2
        %v1310 = vrot.slane %v1215, 7
        %v1311 = vrot.slane %v1310, 2
        %v1312 = vrot.slane %v1217, 7
        %v1313 = vrot.slane %v1312, 2
        %v1346 = vmax.f32 %v1089, %v1251
        %v1347 = vmax.f32 %v1097, %v1253
        %v1348 = vmax.f32 %v1096, %v1255
        %v1349 = vmax.f32 %v1098, %v1257
        %v1350 = vmax.f32 %v1106, %v1259
        %v1351 = vmax.f32 %v1114, %v1261
        %v1352 = vmax.f32 %v1113, %v1263
        %v1353 = vmax.f32 %v1115, %v1265
        %v1354 = vmax.f32 %v1123, %v1267
        %v1355 = vmax.f32 %v1131, %v1269
        %v1356 = vmax.f32 %v1130, %v1271
        %v1357 = vmax.f32 %v1132, %v1273
        %v1358 = vmax.f32 %v1140, %v1275
        %v1359 = vmax.f32 %v1148, %v1277
        %v1360 = vmax.f32 %v1147, %v1279
        %v1361 = vmax.f32 %v1149, %v1281
        %v1362 = vmax.f32 %v1157, %v1283
        %v1363 = vmax.f32 %v1165, %v1285
        %v1364 = vmax.f32 %v1164, %v1287
        %v1365 = vmax.f32 %v1166, %v1289
        %v1366 = vmax.f32 %v1174, %v1291
        %v1367 = vmax.f32 %v1182, %v1293
        %v1368 = vmax.f32 %v1181, %v1295
        %v1369 = vmax.f32 %v1183, %v1297
        %v1370 = vmax.f32 %v1191, %v1299
        %v1371 = vmax.f32 %v1199, %v1301
        %v1372 = vmax.f32 %v1198, %v1303
        %v1373 = vmax.f32 %v1200, %v1305
        %v1374 = vmax.f32 %v1208, %v1307
        %v1375 = vmax.f32 %v1216, %v1309
        %v1376 = vmax.f32 %v1215, %v1311
        %v1377 = vmax.f32 %v1217, %v1313
        %v1378 = vlaneseq
        %v1379 = vshrl.u32 %v1378, 7
        %v1380 = vsub.s32 1, %v1379
        %v1381 = vrot.slane %v1089, %v1380
        %v1382 = vlaneseq
        %v1383 = vshrl.u32 %v1382, 7
        %v1384 = vsub.s32 1, %v1383
        %v1385 = vrot.slane %v1097, %v1384
        %v1386 = vlaneseq
        %v1387 = vshrl.u32 %v1386, 7
        %v1388 = vsub.s32 1, %v1387
        %v1389 = vrot.slane %v1096, %v1388
        %v1390 = vlaneseq
        %v1391 = vshrl.u32 %v1390, 7
        %v1392 = vsub.s32 1, %v1391
        %v1393 = vrot.slane %v1098, %v1392
        %v1394 = vlaneseq
        %v1395 = vshrl.u32 %v1394, 7
        %v1396 = vsub.s32 1, %v1395
        %v1397 = vrot.slane %v1106, %v1396
        %v1398 = vlaneseq
        %v1399 = vshrl.u32 %v1398, 7
        %v1400 = vsub.s32 1, %v1399
        %v1401 = vrot.slane %v1114, %v1400
        %v1402 = vlaneseq
        %v1403 = vshrl.u32 %v1402, 7
        %v1404 = vsub.s32 1, %v1403
        %v1405 = vrot.slane %v1113, %v1404
        %v1406 = vlaneseq
        %v1407 = vshrl.u32 %v1406, 7
        %v1408 = vsub.s32 1, %v1407
        %v1409 = vrot.slane %v1123, %v1408
        %v1410 = vlaneseq
        %v1411 = vshrl.u32 %v1410, 7
        %v1412 = vsub.s32 1, %v1411
        %v1413 = vrot.slane %v1131, %v1412
        %v1414 = vlaneseq
        %v1415 = vshrl.u32 %v1414, 7
        %v1416 = vsub.s32 1, %v1415
        %v1417 = vrot.slane %v1130, %v1416
        %v1418 = vlaneseq
        %v1419 = vshrl.u32 %v1418, 7
        %v1420 = vsub.s32 1, %v1419
        %v1421 = vrot.slane %v1132, %v1420
        %v1422 = vlaneseq
        %v1423 = vshrl.u32 %v1422, 7
        %v1424 = vsub.s32 1, %v1423
        %v1425 = vrot.slane %v1140, %v1424
        %v1426 = vlaneseq
        %v1427 = vshrl.u32 %v1426, 7
        %v1428 = vsub.s32 1, %v1427
        %v1429 = vrot.slane %v1148, %v1428
        %v1430 = vlaneseq
        %v1431 = vshrl.u32 %v1430, 7
        %v1432 = vsub.s32 1, %v1431
        %v1433 = vrot.slane %v1147, %v1432
        %v1434 = vlaneseq
        %v1435 = vshrl.u32 %v1434, 7
        %v1436 = vsub.s32 1, %v1435
        %v1437 = vrot.slane %v1157, %v1436
        %v1438 = vlaneseq
        %v1439 = vshrl.u32 %v1438, 7
        %v1440 = vsub.s32 1, %v1439
        %v1441 = vrot.slane %v1165, %v1440
        %v1442 = vlaneseq
        %v1443 = vshrl.u32 %v1442, 7
        %v1444 = vsub.s32 1, %v1443
        %v1445 = vrot.slane %v1164, %v1444
        %v1446 = vlaneseq
        %v1447 = vshrl.u32 %v1446, 7
        %v1448 = vsub.s32 1, %v1447
        %v1449 = vrot.slane %v1166, %v1448
        %v1450 = vlaneseq
        %v1451 = vshrl.u32 %v1450, 7
        %v1452 = vsub.s32 1, %v1451
        %v1453 = vrot.slane %v1174, %v1452
        %v1454 = vlaneseq
        %v1455 = vshrl.u32 %v1454, 7
        %v1456 = vsub.s32 1, %v1455
        %v1457 = vrot.slane %v1182, %v1456
        %v1458 = vlaneseq
        %v1459 = vshrl.u32 %v1458, 7
        %v1460 = vsub.s32 1, %v1459
        %v1461 = vrot.slane %v1181, %v1460
        %v1462 = vlaneseq
        %v1463 = vshrl.u32 %v1462, 7
        %v1464 = vsub.s32 1, %v1463
        %v1465 = vrot.slane %v1191, %v1464
        %v1466 = vlaneseq
        %v1467 = vshrl.u32 %v1466, 7
        %v1468 = vsub.s32 1, %v1467
        %v1469 = vrot.slane %v1199, %v1468
        %v1470 = vlaneseq
        %v1471 = vshrl.u32 %v1470, 7
        %v1472 = vsub.s32 1, %v1471
        %v1473 = vrot.slane %v1198, %v1472
        %v1474 = vlaneseq
        %v1475 = vshrl.u32 %v1474, 7
        %v1476 = vsub.s32 1, %v1475
        %v1477 = vrot.slane %v1200, %v1476
        %v1478 = vlaneseq
        %v1479 = vshrl.u32 %v1478, 7
        %v1480 = vsub.s32 1, %v1479
        %v1481 = vrot.slane %v1208, %v1480
        %v1482 = vlaneseq
        %v1483 = vshrl.u32 %v1482, 7
        %v1484 = vsub.s32 1, %v1483
        %v1485 = vrot.slane %v1216, %v1484
        %v1486 = vlaneseq
        %v1487 = vshrl.u32 %v1486, 7
        %v1488 = vsub.s32 1, %v1487
        %v1489 = vrot.slane %v1215, %v1488
        %vm1490 = vcmask 1042434
        %v1491 = vsel %vm1490, %v1385, %v1381
        %vm1492 = vcmask 1043459
        %v1493 = vsel %vm1492, %v1389, %v1491
        %vm1494 = vcmask 1044484
        %v1495 = vsel %vm1494, %v1393, %v1493
        %vm1496 = vcmask 1045509
        %v1497 = vsel %vm1496, %v1397, %v1495
        %vm1498 = vcmask 1046534
        %v1499 = vsel %vm1498, %v1401, %v1497
        %vm1500 = vcmask 1047559
        %v1501 = vsel %vm1500, %v1405, %v1499
        %v1502 = vsel %vm1490, %v1413, %v1409
        %v1503 = vsel %vm1492, %v1417, %v1502
        %v1504 = vsel %vm1494, %v1421, %v1503
        %v1505 = vsel %vm1496, %v1425, %v1504
        %v1506 = vsel %vm1498, %v1429, %v1505
        %v1507 = vsel %vm1500, %v1433, %v1506
        %v1508 = vsel %vm1490, %v1441, %v1437
        %v1509 = vsel %vm1492, %v1445, %v1508
        %v1510 = vsel %vm1494, %v1449, %v1509
        %v1511 = vsel %vm1496, %v1453, %v1510
        %v1512 = vsel %vm1498, %v1457, %v1511
        %v1513 = vsel %vm1500, %v1461, %v1512
        %v1514 = vsel %vm1490, %v1469, %v1465
        %v1515 = vsel %vm1492, %v1473, %v1514
        %v1516 = vsel %vm1494, %v1477, %v1515
        %v1517 = vsel %vm1496, %v1481, %v1516
        %v1518 = vsel %vm1498, %v1485, %v1517
        %v1519 = vsel %vm1500, %v1489, %v1518
        %vm1524 = vcmask 1040384
        %v1525 = vsel %vm1524, 0.0, %v1501
        %v1526 = vsel %vm1524, 0.0, %v1507
        %v1527 = vsel %vm1524, 0.0, %v1513
        %v1528 = vsel %vm1524, 0.0, %v1519
        %v1533 = vcombine.high %v1525, %v1525
        %v1535 = vunpack.c.l.s4 1983009808
        %v1536 = vunpack.c.0.s8 %v1535
        %v1537 = vlaneseq
        %v1538 = vshrl.u32 %v1537, 7
        %v1539 = vsub.s32 %v1536, %v1538
        %v1540 = vrot.slane %v1525, %v1539
        %v1542 = vunpack.c.l.s4 1983009808
        %v1543 = vunpack.c.0.s8 %v1542
        %v1544 = vlaneseq
        %v1545 = vshrl.u32 %v1544, 7
        %v1546 = vsub.s32 %v1543, %v1545
        %v1547 = vrot.slane %v1533, %v1546
        %v1548 = vcombine.high %v1540, %v1540
        %v1549 = vcombine.high %v1547, %v1547
        %v1550 = vcombine.high %v1526, %v1526
        %v1552 = vunpack.c.l.s4 1983009808
        %v1553 = vunpack.c.0.s8 %v1552
        %v1554 = vlaneseq
        %v1555 = vshrl.u32 %v1554, 7
        %v1556 = vsub.s32 %v1553, %v1555
        %v1557 = vrot.slane %v1526, %v1556
        %v1559 = vunpack.c.l.s4 1983009808
        %v1560 = vunpack.c.0.s8 %v1559
        %v1561 = vlaneseq
        %v1562 = vshrl.u32 %v1561, 7
        %v1563 = vsub.s32 %v1560, %v1562
        %v1564 = vrot.slane %v1550, %v1563
        %v1565 = vcombine.high %v1557, %v1557
        %v1566 = vcombine.high %v1564, %v1564
        %v1567 = vcombine.high %v1527, %v1527
        %v1569 = vunpack.c.l.s4 1983009808
        %v1570 = vunpack.c.0.s8 %v1569
        %v1571 = vlaneseq
        %v1572 = vshrl.u32 %v1571, 7
        %v1573 = vsub.s32 %v1570, %v1572
        %v1574 = vrot.slane %v1527, %v1573
        %v1576 = vunpack.c.l.s4 1983009808
        %v1577 = vunpack.c.0.s8 %v1576
        %v1578 = vlaneseq
        %v1579 = vshrl.u32 %v1578, 7
        %v1580 = vsub.s32 %v1577, %v1579
        %v1581 = vrot.slane %v1567, %v1580
        %v1582 = vcombine.high %v1574, %v1574
        %v1583 = vcombine.high %v1581, %v1581
        %v1584 = vcombine.high %v1528, %v1528
        %v1586 = vunpack.c.l.s4 1983009808
        %v1587 = vunpack.c.0.s8 %v1586
        %v1588 = vlaneseq
        %v1589 = vshrl.u32 %v1588, 7
        %v1590 = vsub.s32 %v1587, %v1589
        %v1591 = vrot.slane %v1528, %v1590
        %v1593 = vunpack.c.l.s4 1983009808
        %v1594 = vunpack.c.0.s8 %v1593
        %v1595 = vlaneseq
        %v1596 = vshrl.u32 %v1595, 7
        %v1597 = vsub.s32 %v1594, %v1596
        %v1598 = vrot.slane %v1584, %v1597
        %v1599 = vcombine.high %v1591, %v1591
        %v1600 = vcombine.high %v1598, %v1598
        %v1601 = vrot.slane %v1540, 1
        %v1602 = vrot.slane %v1548, 1
        %v1603 = vrot.slane %v1547, 1
        %v1604 = vrot.slane %v1549, 1
        %v1605 = vrot.slane %v1557, 1
        %v1606 = vrot.slane %v1565, 1
        %v1607 = vrot.slane %v1564, 1
        %v1608 = vrot.slane %v1566, 1
        %v1609 = vrot.slane %v1574, 1
        %v1610 = vrot.slane %v1582, 1
        %v1611 = vrot.slane %v1581, 1
        %v1612 = vrot.slane %v1583, 1
        %v1613 = vrot.slane %v1591, 1
        %v1614 = vrot.slane %v1599, 1
        %v1615 = vrot.slane %v1598, 1
        %v1616 = vrot.slane %v1600, 1
        %v1649 = vmax.f32 %v1346, %v1540
        %v1650 = vmax.f32 %v1347, %v1601
        %v1651 = vmax.f32 %v1348, %v1548
        %v1652 = vmax.f32 %v1349, %v1602
        %v1653 = vmax.f32 %v1350, %v1547
        %v1654 = vmax.f32 %v1351, %v1603
        %v1655 = vmax.f32 %v1352, %v1549
        %v1656 = vmax.f32 %v1353, %v1604
        %v1657 = vmax.f32 %v1354, %v1557
        %v1658 = vmax.f32 %v1355, %v1605
        %v1659 = vmax.f32 %v1356, %v1565
        %v1660 = vmax.f32 %v1357, %v1606
        %v1661 = vmax.f32 %v1358, %v1564
        %v1662 = vmax.f32 %v1359, %v1607
        %v1663 = vmax.f32 %v1360, %v1566
        %v1664 = vmax.f32 %v1361, %v1608
        %v1665 = vmax.f32 %v1362, %v1574
        %v1666 = vmax.f32 %v1363, %v1609
        %v1667 = vmax.f32 %v1364, %v1582
        %v1668 = vmax.f32 %v1365, %v1610
        %v1669 = vmax.f32 %v1366, %v1581
        %v1670 = vmax.f32 %v1367, %v1611
        %v1671 = vmax.f32 %v1368, %v1583
        %v1672 = vmax.f32 %v1369, %v1612
        %v1673 = vmax.f32 %v1370, %v1591
        %v1674 = vmax.f32 %v1371, %v1613
        %v1675 = vmax.f32 %v1372, %v1599
        %v1676 = vmax.f32 %v1373, %v1614
        %v1677 = vmax.f32 %v1374, %v1598
        %v1678 = vmax.f32 %v1375, %v1615
        %v1679 = vmax.f32 %v1376, %v1600
        %v1680 = vmax.f32 %v1377, %v1616
        %v1713 = vlaneseq
        %v1714 = vshrl.u32 %v1713, 7
        %v1715 = vsub.s32 0, %v1714
        %v1716 = vrot.slane %v1649, %v1715
        %v1717 = vlaneseq
        %v1718 = vshrl.u32 %v1717, 7
        %v1719 = vsub.s32 0, %v1718
        %v1720 = vrot.slane %v1650, %v1719
        %v1721 = vlaneseq
        %v1722 = vshrl.u32 %v1721, 7
        %v1723 = vsub.s32 0, %v1722
        %v1724 = vrot.slane %v1651, %v1723
        %v1725 = vlaneseq
        %v1726 = vshrl.u32 %v1725, 7
        %v1727 = vsub.s32 0, %v1726
        %v1728 = vrot.slane %v1652, %v1727
        %v1729 = vlaneseq
        %v1730 = vshrl.u32 %v1729, 7
        %v1731 = vsub.s32 0, %v1730
        %v1732 = vrot.slane %v1653, %v1731
        %v1733 = vlaneseq
        %v1734 = vshrl.u32 %v1733, 7
        %v1735 = vsub.s32 0, %v1734
        %v1736 = vrot.slane %v1654, %v1735
        %v1737 = vlaneseq
        %v1738 = vshrl.u32 %v1737, 7
        %v1739 = vsub.s32 0, %v1738
        %v1740 = vrot.slane %v1655, %v1739
        %v1741 = vlaneseq
        %v1742 = vshrl.u32 %v1741, 7
        %v1743 = vsub.s32 0, %v1742
        %v1744 = vrot.slane %v1656, %v1743
        %v1745 = vlaneseq
        %v1746 = vshrl.u32 %v1745, 7
        %v1747 = vsub.s32 0, %v1746
        %v1748 = vrot.slane %v1657, %v1747
        %v1749 = vlaneseq
        %v1750 = vshrl.u32 %v1749, 7
        %v1751 = vsub.s32 0, %v1750
        %v1752 = vrot.slane %v1658, %v1751
        %v1753 = vlaneseq
        %v1754 = vshrl.u32 %v1753, 7
        %v1755 = vsub.s32 0, %v1754
        %v1756 = vrot.slane %v1659, %v1755
        %v1757 = vlaneseq
        %v1758 = vshrl.u32 %v1757, 7
        %v1759 = vsub.s32 0, %v1758
        %v1760 = vrot.slane %v1660, %v1759
        %v1761 = vlaneseq
        %v1762 = vshrl.u32 %v1761, 7
        %v1763 = vsub.s32 0, %v1762
        %v1764 = vrot.slane %v1661, %v1763
        %v1765 = vlaneseq
        %v1766 = vshrl.u32 %v1765, 7
        %v1767 = vsub.s32 0, %v1766
        %v1768 = vrot.slane %v1662, %v1767
        %v1769 = vlaneseq
        %v1770 = vshrl.u32 %v1769, 7
        %v1771 = vsub.s32 0, %v1770
        %v1772 = vrot.slane %v1663, %v1771
        %v1773 = vlaneseq
        %v1774 = vshrl.u32 %v1773, 7
        %v1775 = vsub.s32 0, %v1774
        %v1776 = vrot.slane %v1664, %v1775
        %v1777 = vlaneseq
        %v1778 = vshrl.u32 %v1777, 7
        %v1779 = vsub.s32 0, %v1778
        %v1780 = vrot.slane %v1665, %v1779
        %v1781 = vlaneseq
        %v1782 = vshrl.u32 %v1781, 7
        %v1783 = vsub.s32 0, %v1782
        %v1784 = vrot.slane %v1666, %v1783
        %v1785 = vlaneseq
        %v1786 = vshrl.u32 %v1785, 7
        %v1787 = vsub.s32 0, %v1786
        %v1788 = vrot.slane %v1667, %v1787
        %v1789 = vlaneseq
        %v1790 = vshrl.u32 %v1789, 7
        %v1791 = vsub.s32 0, %v1790
        %v1792 = vrot.slane %v1668, %v1791
        %v1793 = vlaneseq
        %v1794 = vshrl.u32 %v1793, 7
        %v1795 = vsub.s32 0, %v1794
        %v1796 = vrot.slane %v1669, %v1795
        %v1797 = vlaneseq
        %v1798 = vshrl.u32 %v1797, 7
        %v1799 = vsub.s32 0, %v1798
        %v1800 = vrot.slane %v1670, %v1799
        %v1801 = vlaneseq
        %v1802 = vshrl.u32 %v1801, 7
        %v1803 = vsub.s32 0, %v1802
        %v1804 = vrot.slane %v1671, %v1803
        %v1805 = vlaneseq
        %v1806 = vshrl.u32 %v1805, 7
        %v1807 = vsub.s32 0, %v1806
        %v1808 = vrot.slane %v1672, %v1807
        %v1809 = vlaneseq
        %v1810 = vshrl.u32 %v1809, 7
        %v1811 = vsub.s32 0, %v1810
        %v1812 = vrot.slane %v1673, %v1811
        %v1813 = vlaneseq
        %v1814 = vshrl.u32 %v1813, 7
        %v1815 = vsub.s32 0, %v1814
        %v1816 = vrot.slane %v1674, %v1815
        %v1817 = vlaneseq
        %v1818 = vshrl.u32 %v1817, 7
        %v1819 = vsub.s32 0, %v1818
        %v1820 = vrot.slane %v1675, %v1819
        %v1821 = vlaneseq
        %v1822 = vshrl.u32 %v1821, 7
        %v1823 = vsub.s32 0, %v1822
        %v1824 = vrot.slane %v1676, %v1823
        %v1825 = vlaneseq
        %v1826 = vshrl.u32 %v1825, 7
        %v1827 = vsub.s32 0, %v1826
        %v1828 = vrot.slane %v1677, %v1827
        %v1829 = vlaneseq
        %v1830 = vshrl.u32 %v1829, 7
        %v1831 = vsub.s32 0, %v1830
        %v1832 = vrot.slane %v1678, %v1831
        %v1833 = vlaneseq
        %v1834 = vshrl.u32 %v1833, 7
        %v1835 = vsub.s32 0, %v1834
        %v1836 = vrot.slane %v1679, %v1835
        %v1837 = vlaneseq
        %v1838 = vshrl.u32 %v1837, 7
        %v1839 = vsub.s32 0, %v1838
        %v1840 = vrot.slane %v1680, %v1839
        %vm1841 = vcmask 1041409
        %v1842 = vsel %vm1841, %v1720, %v1716
        %v1843 = vsel %vm1490, %v1724, %v1842
        %v1844 = vsel %vm1492, %v1728, %v1843
        %v1845 = vsel %vm1494, %v1732, %v1844
        %v1846 = vsel %vm1496, %v1736, %v1845
        %v1847 = vsel %vm1498, %v1740, %v1846
        %v1848 = vsel %vm1500, %v1744, %v1847
        %v1849 = vsel %vm1841, %v1752, %v1748
        %v1850 = vsel %vm1490, %v1756, %v1849
        %v1851 = vsel %vm1492, %v1760, %v1850
        %v1852 = vsel %vm1494, %v1764, %v1851
        %v1853 = vsel %vm1496, %v1768, %v1852
        %v1854 = vsel %vm1498, %v1772, %v1853
        %v1855 = vsel %vm1500, %v1776, %v1854
        %v1856 = vsel %vm1841, %v1784, %v1780
        %v1857 = vsel %vm1490, %v1788, %v1856
        %v1858 = vsel %vm1492, %v1792, %v1857
        %v1859 = vsel %vm1494, %v1796, %v1858
        %v1860 = vsel %vm1496, %v1800, %v1859
        %v1861 = vsel %vm1498, %v1804, %v1860
        %v1862 = vsel %vm1500, %v1808, %v1861
        %v1863 = vsel %vm1841, %v1816, %v1812
        %v1864 = vsel %vm1490, %v1820, %v1863
        %v1865 = vsel %vm1492, %v1824, %v1864
        %v1866 = vsel %vm1494, %v1828, %v1865
        %v1867 = vsel %vm1496, %v1832, %v1866
        %v1868 = vsel %vm1498, %v1836, %v1867
        %v1869 = vsel %vm1500, %v1840, %v1868
        %1874 = vst.msk [vmem:[%s250] sm:$0xff] %vm728, %v1848
        %1875 = vst.msk [vmem:[%s250 + $0x8] sm:$0xff] %vm728, %v1855
        %1876 = vst.msk [vmem:[%s250 + $0x10] sm:$0xff] %vm728, %v1862
        %1877 = vst.msk [vmem:[%s250 + $0x18] sm:$0xff] %vm728, %v1869
        %s1878 = sand.u32 %s140, 1
        %s1879 = scalar_lea.sflag [#allocation3], %s1878
        %s1880 = sand.u32 %s140, 1
        %s1881 = smul.addr %s1880, 32
        %s1882 = scalar_lea.vmem [#allocation2], %s1881
        // Predicated region
        $region37: #{tpu_custom_call.1} parent=35 // pred_check
          %p1883 = pneg %p150
        $region38: #{tpu_custom_call.1} parent=35 // pred_check_branch
          %1885 = sbr.rel (%p1883) target = $region40
        $region39: #{tpu_custom_call.1} parent=35 // pred_region
          %s1886 = smul.u32 4, %s23
          %s1888 = ssub.s32 512, 512
          %1889 = vsyncadd %s1879, %s1888
          %s1890 = smul.addr %s22, 8
          %s1891 = sadd.s32 %s1886, %s1890
          %s1892 = smul.addr %s1891, 128
          %s1893 = scalar_lea.hbm %s4, %s1892
          %s1894 = sshll.u32 %s1882, 4
          %s1895 = int_to_ptr.vmem [resolvable:$true] %s1894
          %1900 = dma.vmem_to_hbm [thread:$0]  %s1895, 512, %s1893, %s1879, 128, 128, 8
        $region40: #{tpu_custom_call.1} parent=35 // pred_fallthru
          _
      $region36: #{tpu_custom_call.1} parent=5 // pred_fallthru
        _
      %p1901 = scmp.le.s32.totalorder 2, %s13
      // Predicated region
      $region41: #{tpu_custom_call.1} parent=5 // pred_check
        %p1902 = pneg %p1901
      $region42: #{tpu_custom_call.1} parent=5 // pred_check_branch
        %1904 = sbr.rel (%p1902) target = $region44
      $region43: #{tpu_custom_call.1} parent=5 // pred_region
        %s1905 = ssub.s32 %s13, 2
        // Predicated region
        $region45: #{tpu_custom_call.1} parent=43 // pred_check
          %p1906 = pneg %p156
        $region46: #{tpu_custom_call.1} parent=43 // pred_check_branch
          %1908 = sbr.rel (%p1906) target = $region48
        $region47: #{tpu_custom_call.1} parent=43 // pred_region
          %s1909 = sand.u32 %s141, 1
          %s1910 = scalar_lea.sflag [#allocation3], %s1909
          %s1911 = sand.u32 %s141, 1
          %s1912 = smul.addr %s1911, 32
          %s1913 = scalar_lea.vmem [#allocation2], %s1912
          %1914 = dma.done %s1910, 512
        $region48: #{tpu_custom_call.1} parent=43 // pred_fallthru
          _
      $region44: #{tpu_custom_call.1} parent=5 // pred_fallthru
        _
    $region6: #{tpu_custom_call.1} parent=1 // loop_footer
      %s17 = sadd.s32 1, %s13
    $region7: #{tpu_custom_call.1} parent=1 // loop_footer_branch
      %12 = sbr.rel target = $region3
    $region8: #{tpu_custom_call.1} parent=1 // loop_exit
      _
    %1915 = vsyncpa [#allocation3], 1
    %s1916 = scalar_lea.sflag [#allocation3], 1
    %1917 = vsyncpa %s1916, 1

</llo_original>
